<compile_context>
chip_gen: v5e
topology: v5e:2x2
jax: 0.10.0
libtpu: 0.0.40
codegen_flags: <defaults>
</compile_context>

<pallas_src>
import functools
import math

import jax
import jax.numpy as jnp
from jax.experimental import pallas as pl
from jax.experimental.pallas import tpu as pltpu

NEG_SLOPE = 0.2     # GATConv default LeakyReLU slope
BN_EPS = 1e-5
NEG_INF = -1e30

DIM1, DIM2, DIM3 = 116, 16, 16
DIM1P = 128         # DIM1 zero-padded to a lane-dense width


def _vmem_specs(n):
    return [pl.BlockSpec(memory_space=pltpu.MemorySpace.VMEM) for _ in range(n)]


# ----------------------------------------------------------------------------
# Kernel 1: GATConv1 (self-loop mask built in-kernel) + TopKPooling-1 score
# ----------------------------------------------------------------------------
def gat1_kernel(x_ref, adj_ref, w_ref, att_src_ref, att_dst_ref, bias_ref,
                phat_ref, out_ref, score_ref):
    h = jnp.dot(x_ref[...], w_ref[...],
                preferred_element_type=jnp.float32)                  # [N, 128]

    a_dst = jax.lax.dot_general(h, att_dst_ref[...], (((1,), (1,)), ((), ())),
                                preferred_element_type=jnp.float32)  # [N, 1]
    a_src = jax.lax.dot_general(att_src_ref[...], h, (((1,), (1,)), ((), ())),
                                preferred_element_type=jnp.float32)  # [1, N]
    e = a_dst + a_src                                                # [N, N]
    e = jnp.where(e > 0, e, NEG_SLOPE * e)                           # LeakyReLU

    n = adj_ref.shape[0]
    r = jax.lax.broadcasted_iota(jnp.int32, (n, n), 0)
    c = jax.lax.broadcasted_iota(jnp.int32, (n, n), 1)
    mask = (adj_ref[...] > 0.0) | (r == c)        # adjacency + self loops
    e = jnp.where(mask, e, NEG_INF)               # every row has its diag entry

    m = jnp.max(e, axis=-1, keepdims=True)
    p = jnp.exp(e - m)
    inv = pl.reciprocal(jnp.sum(p, axis=-1, keepdims=True), approx=True)
    alpha = p * inv                               # softmax over sources j

    out = jnp.dot(alpha, h, preferred_element_type=jnp.float32) + bias_ref[...]
    out_ref[...] = out

    s = jax.lax.dot_general(out, phat_ref[...], (((1,), (1,)), ((), ())),
                            preferred_element_type=jnp.float32)      # [N, 1]
    score_ref[...] = jax.nn.sigmoid(s)


def gat1(x, adj, kp):
    n = x.shape[0]
    return pl.pallas_call(
        gat1_kernel,
        out_shape=(jax.ShapeDtypeStruct((n, DIM1P), jnp.float32),
                   jax.ShapeDtypeStruct((n, 1), jnp.float32)),
        in_specs=_vmem_specs(7),
        out_specs=tuple(_vmem_specs(2)),
    )(x, adj, kp['w1'], kp['att_src1'], kp['att_dst1'], kp['bias1'],
      kp['p1_hat'])


# ----------------------------------------------------------------------------
# Kernel 2: fused [TopK-1 gather + score mult] -> augment_adj -> GATConv2
#           -> TopKPooling-2 score
# ----------------------------------------------------------------------------
def gat2_kernel(h1_ref, perm_ref, score_ref, adj_ref, ea_ref,
                w_ref, att_src_ref, att_dst_ref, bias_ref, phat_ref,
                xp_ref, out_ref, score2_ref):
    n1 = perm_ref.shape[0]
    n = adj_ref.shape[0]

    # one-hot selection matrix for the kept nodes (TopKPooling gather in-kernel)
    cols = jax.lax.broadcasted_iota(jnp.int32, (n1, n), 1)
    sel = jnp.where(cols == perm_ref[...], 1.0, 0.0)                 # [n1, N]

    # pooled node features: x[perm] * score  (TopKPooling multiplier = 1)
    xp = jnp.dot(sel, h1_ref[...], preferred_element_type=jnp.float32)
    xp = xp * score_ref[...]
    xp_ref[...] = xp                                                 # [n1, 128]

    # gather adjacency / edge weights to the kept sub-graph: P @ M @ P^T
    def permute(m):
        t = jnp.dot(sel, m, preferred_element_type=jnp.float32)
        return jax.lax.dot_general(t, sel, (((1,), (1,)), ((), ())),
                                   preferred_element_type=jnp.float32)

    adj_p = permute(adj_ref[...])
    ea_p = permute(ea_ref[...])

    # augment_adj: nonzero pattern of (A_w + I) @ (A_w + I).  The diagonal is
    # kept here; PyG removes it after spspmm but GATConv re-adds self loops,
    # so the effective attention mask is identical.  Pattern == structural
    # 2-hop reachability because the edge weights are strictly positive.
    r = jax.lax.broadcasted_iota(jnp.int32, (n1, n1), 0)
    c = jax.lax.broadcasted_iota(jnp.int32, (n1, n1), 1)
    eye = jnp.where(r == c, 1.0, 0.0)
    a_sl = jnp.where(adj_p > 0.0, ea_p, 0.0) + eye
    mask2 = jnp.dot(a_sl, a_sl, preferred_element_type=jnp.float32) > 0.0

    # GATConv 2
    h = jnp.dot(xp, w_ref[...], preferred_element_type=jnp.float32)  # [n1, 16]
    a_dst = jax.lax.dot_general(h, att_dst_ref[...], (((1,), (1,)), ((), ())),
                                preferred_element_type=jnp.float32)
    a_src = jax.lax.dot_general(att_src_ref[...], h, (((1,), (1,)), ((), ())),
                                preferred_element_type=jnp.float32)
    e = a_dst + a_src
    e = jnp.where(e > 0, e, NEG_SLOPE * e)
    e = jnp.where(mask2, e, NEG_INF)              # diag always present
    m = jnp.max(e, axis=-1, keepdims=True)
    p = jnp.exp(e - m)
    inv = pl.reciprocal(jnp.sum(p, axis=-1, keepdims=True), approx=True)
    alpha = p * inv

    out = jnp.dot(alpha, h, preferred_element_type=jnp.float32) + bias_ref[...]
    out_ref[...] = out                                               # [n1, 16]

    s = jax.lax.dot_general(out, phat_ref[...], (((1,), (1,)), ((), ())),
                            preferred_element_type=jnp.float32)
    score2_ref[...] = jax.nn.sigmoid(s)


def gat2(h1, perm1, score1, adj, edge_attr, kp):
    n1 = perm1.shape[0]
    return pl.pallas_call(
        gat2_kernel,
        out_shape=(jax.ShapeDtypeStruct((n1, DIM1P), jnp.float32),
                   jax.ShapeDtypeStruct((n1, DIM2), jnp.float32),
                   jax.ShapeDtypeStruct((n1, 1), jnp.float32)),
        in_specs=_vmem_specs(10),
        out_specs=tuple(_vmem_specs(3)),
    )(h1, perm1, score1, adj, edge_attr,
      kp['w2'], kp['att_src2'], kp['att_dst2'], kp['bias2'], kp['p2_hat'])


# ----------------------------------------------------------------------------
# Kernel 3: fused [TopK-2 gather + score mult] + gmp/gap readouts (both levels)
#           + fc1/relu/(bn4 folded)/fc2/relu/(bn5 folded)/fc3/log_softmax.
#           fc1 is expressed as 4 partial matmuls -> no concatenations.
#           Dropout(p=0.5) is identity in eval mode.
# ----------------------------------------------------------------------------
def make_readout_head_kernel(batch_size, k1, k2):
    def kernel(xp1_ref, out2_ref, perm2_ref, score2_ref,
               wa_ref, wb_ref, wc_ref, wd_ref, b1_ref,
               w2_ref, b2_ref, w3_ref, b3_ref, o_ref):
        n1 = out2_ref.shape[0]
        n2 = perm2_ref.shape[0]

        # TopKPooling-2 gather + score multiply via one-hot matmul
        cols = jax.lax.broadcasted_iota(jnp.int32, (n2, n1), 1)
        sel = jnp.where(cols == perm2_ref[...], 1.0, 0.0)            # [n2, n1]
        xp2 = jnp.dot(sel, out2_ref[...], preferred_element_type=jnp.float32)
        xp2 = xp2 * score2_ref[...]                                  # [n2, 16]

        for b in range(batch_size):                  # static trip count
            seg1 = xp1_ref[b * k1:(b + 1) * k1, :]                   # [k1, 128]
            seg2 = xp2[b * k2:(b + 1) * k2, :]                       # [k2, 16]
            mx1 = jnp.max(seg1, axis=0, keepdims=True)
            mn1 = jnp.mean(seg1, axis=0, keepdims=True)
            mx2 = jnp.max(seg2, axis=0, keepdims=True)
            mn2 = jnp.mean(seg2, axis=0, keepdims=True)

            # fc1 = [mx1|mn1|mx2|mn2] @ W1 + b1, as partial matmuls
            h = (jnp.dot(mx1, wa_ref[...], preferred_element_type=jnp.float32)
                 + jnp.dot(mn1, wb_ref[...], preferred_element_type=jnp.float32)
                 + jnp.dot(mx2, wc_ref[...], preferred_element_type=jnp.float32)
                 + jnp.dot(mn2, wd_ref[...], preferred_element_type=jnp.float32)
                 + b1_ref[...])
            h = jnp.maximum(h, 0.0)                  # relu (bn4 folded in fc2)
            h = jnp.dot(h, w2_ref[...],
                        preferred_element_type=jnp.float32) + b2_ref[...]
            h = jnp.maximum(h, 0.0)                  # relu (bn5 folded in fc3)
            z = jnp.dot(h, w3_ref[...],
                        preferred_element_type=jnp.float32) + b3_ref[...]
            m = jnp.max(z, axis=-1, keepdims=True)
            lse = m + jnp.log(jnp.sum(jnp.exp(z - m), axis=-1, keepdims=True))
            o_ref[b:b + 1, :] = z - lse
    return kernel


def readout_head(xp1, out2, perm2, score2, kp, batch_size, k1, k2):
    kernel = make_readout_head_kernel(batch_size, k1, k2)
    return pl.pallas_call(
        kernel,
        out_shape=jax.ShapeDtypeStruct((batch_size, 2), jnp.float32),
        in_specs=_vmem_specs(13),
        out_specs=pl.BlockSpec(memory_space=pltpu.MemorySpace.VMEM),
    )(xp1, out2, perm2, score2,
      kp['fc1_wa'], kp['fc1_wb'], kp['fc1_wc'], kp['fc1_wd'], kp['fc1_b'],
      kp['fc2_wf'], kp['fc2_bf'], kp['fc3_wf'], kp['fc3_bf'])


# ----------------------------------------------------------------------------
# Glue: only the data-dependent top-k selection stays in JAX
# ----------------------------------------------------------------------------
def topk_select(score, batch_size, n_per_graph, k):
    s = score.reshape(batch_size, n_per_graph)
    _, idx = jax.lax.top_k(s, k)                        # descending per graph
    perm = (idx + (jnp.arange(batch_size) * n_per_graph)[:, None]).reshape(-1)
    perm = perm.astype(jnp.int32)
    return perm, score[perm]


# ----------------------------------------------------------------------------
# Parameters (deterministic, synthetic) + kernel-ready preparation
# ----------------------------------------------------------------------------
def init_params(key, indim):
    ks = jax.random.split(key, 20)

    def nrm(k, shape, scale=0.1):
        return scale * jax.random.normal(k, shape, dtype=jnp.float32)

    return dict(
        w1=nrm(ks[0], (indim, DIM1)),
        att_src1=nrm(ks[1], (1, DIM1)),
        att_dst1=nrm(ks[2], (1, DIM1)),
        bias1=nrm(ks[3], (1, DIM1)),
        pool1_w=nrm(ks[4], (1, DIM1)) + 0.05,
        w2=nrm(ks[5], (DIM1, DIM2)),
        att_src2=nrm(ks[6], (1, DIM2)),
        att_dst2=nrm(ks[7], (1, DIM2)),
        bias2=nrm(ks[8], (1, DIM2)),
        pool2_w=nrm(ks[9], (1, DIM2)) + 0.05,
        fc1_w=nrm(ks[10], ((DIM1 + DIM2) * 2, DIM2)),
        fc1_b=nrm(ks[11], (1, DIM2)),
        bn4_gamma=jnp.ones((1, DIM2), jnp.float32),
        bn4_beta=jnp.zeros((1, DIM2), jnp.float32),
        bn4_mean=nrm(ks[12], (1, DIM2)),
        bn4_var=jnp.ones((1, DIM2), jnp.float32) + 0.1,
        fc2_w=nrm(ks[13], (DIM2, DIM3)),
        fc2_b=nrm(ks[14], (1, DIM3)),
        bn5_gamma=jnp.ones((1, DIM3), jnp.float32),
        bn5_beta=jnp.zeros((1, DIM3), jnp.float32),
        bn5_mean=nrm(ks[15], (1, DIM3)),
        bn5_var=jnp.ones((1, DIM3), jnp.float32) + 0.1,
        fc3_w=nrm(ks[16], (DIM3, 2)),
        fc3_b=nrm(ks[17], (1, 2)),
    )


def prepare_params(p):
    """One-time: pad DIM1 -> 128 (lane dense), fold BN4/BN5 into fc2/fc3,
    split fc1 into partial-matmul weights, pre-normalize TopK projections."""
    pad1 = DIM1P - DIM1

    def pad_cols(a):
        return jnp.pad(a, ((0, 0), (0, pad1)))

    p1_hat = p['pool1_w'] / jnp.linalg.norm(p['pool1_w'])
    p2_hat = p['pool2_w'] / jnp.linalg.norm(p['pool2_w'])

    s4 = p['bn4_gamma'] / jnp.sqrt(p['bn4_var'] + BN_EPS)
    t4 = p['bn4_beta'] - p['bn4_mean'] * s4
    s5 = p['bn5_gamma'] / jnp.sqrt(p['bn5_var'] + BN_EPS)
    t5 = p['bn5_beta'] - p['bn5_mean'] * s5

    fc1 = p['fc1_w']
    return dict(
        w1=pad_cols(p['w1']),                                    # [indim, 128]
        att_src1=pad_cols(p['att_src1']),
        att_dst1=pad_cols(p['att_dst1']),
        bias1=pad_cols(p['bias1']),
        p1_hat=pad_cols(p1_hat),
        w2=jnp.pad(p['w2'], ((0, pad1), (0, 0))),                # [128, 16]
        att_src2=p['att_src2'],
        att_dst2=p['att_dst2'],
        bias2=p['bias2'],
        p2_hat=p2_hat,
        fc1_wa=jnp.pad(fc1[0:DIM1], ((0, pad1), (0, 0))),        # gmp1 rows
        fc1_wb=jnp.pad(fc1[DIM1:2 * DIM1], ((0, pad1), (0, 0))), # gap1 rows
        fc1_wc=fc1[2 * DIM1:2 * DIM1 + DIM2],                    # gmp2 rows
        fc1_wd=fc1[2 * DIM1 + DIM2:],                            # gap2 rows
        fc1_b=p['fc1_b'],
        fc2_wf=p['fc2_w'] * s4.reshape(DIM2, 1),                 # bn4 folded
        fc2_bf=p['fc2_b'] + t4 @ p['fc2_w'],
        fc3_wf=p['fc3_w'] * s5.reshape(DIM3, 1),                 # bn5 folded
        fc3_bf=p['fc3_b'] + t5 @ p['fc3_w'],
    )


# ----------------------------------------------------------------------------
# Full forward
# ----------------------------------------------------------------------------
@functools.partial(jax.jit,
                   static_argnames=('batch_size', 'n_per_graph', 'ratio'))
def nngat_forward(kp, x, adj, edge_attr, batch_size, n_per_graph, ratio):
    k1 = int(math.ceil(ratio * n_per_graph))
    k2 = int(math.ceil(ratio * k1))

    # ---- conv1 (self loops in-kernel) + pool1 score ----
    h1, s1 = gat1(x, adj, kp)
    s1 = s1[:, 0]
    # TODO(synk): the `if x.norm(...).min() == 0: print(...)` debug check is omitted.

    # ---- TopKPooling 1: only the top_k selection in glue ----
    perm1, score1 = topk_select(s1, batch_size, n_per_graph, k1)

    # ---- fused: pool-1 gather, augment_adj, conv2, pool2 score ----
    xp1, out2, s2 = gat2(h1, perm1.reshape(-1, 1), score1.reshape(-1, 1),
                         adj, edge_attr, kp)
    s2 = s2[:, 0]
    perm2, score2 = topk_select(s2, batch_size, k1, k2)

    # ---- fused: pool-2 gather, gmp/gap readouts (both levels), MLP head ----
    out = readout_head(xp1, out2, perm2.reshape(-1, 1), score2.reshape(-1, 1),
                       kp, batch_size, k1, k2)
    return out, score1, score2


if __name__ == "__main__":
    key = jax.random.PRNGKey(0)
    batch_size, n_per_graph, indim = 2, 8, 8
    ratio = 0.5
    n_total = batch_size * n_per_graph

    kx, ka, ke, kparam = jax.random.split(key, 4)
    x = jax.random.normal(kx, (n_total, indim), dtype=jnp.float32)

    # dense adjacency (no self loops, no cross-graph edges); batch implicit
    adj = (jax.random.uniform(ka, (n_total, n_total)) < 0.35).astype(jnp.float32)
    gids = jnp.repeat(jnp.arange(batch_size), n_per_graph)
    same_graph = (gids[:, None] == gids[None, :]).astype(jnp.float32)
    adj = adj * same_graph * (1.0 - jnp.eye(n_total, dtype=jnp.float32))
    edge_attr = (0.1 + 0.9 * jax.random.uniform(ke, (n_total, n_total))) * adj

    params = prepare_params(init_params(kparam, indim))

    out, score1, score2 = nngat_forward(params, x, adj, edge_attr,
                                        batch_size, n_per_graph, ratio)
    jax.block_until_ready(out)
    jax.block_until_ready(score1)
    jax.block_until_ready(score2)

    k1 = int(math.ceil(ratio * n_per_graph))
    k2 = int(math.ceil(ratio * k1))
    assert out.shape == (batch_size, 2)
    assert score1.shape == (batch_size * k1,)
    assert score2.shape == (batch_size * k2,)
    assert bool(jnp.all(jnp.isfinite(out)))
    print("KERNEL_OK")
</pallas_src>

<mosaic_0001>
module attributes {stable_mosaic.version = 11 : i64} {
  func.func @gat1_kernel(%arg0: memref<16x8xf32, #tpu.memory_space<vmem>>, %arg1: memref<16x16xf32, #tpu.memory_space<vmem>>, %arg2: memref<8x128xf32, #tpu.memory_space<vmem>>, %arg3: memref<1x128xf32, #tpu.memory_space<vmem>>, %arg4: memref<1x128xf32, #tpu.memory_space<vmem>>, %arg5: memref<1x128xf32, #tpu.memory_space<vmem>>, %arg6: memref<1x128xf32, #tpu.memory_space<vmem>>, %arg7: memref<16x128xf32, #tpu.memory_space<vmem>>, %arg8: memref<16x1xf32, #tpu.memory_space<vmem>>) attributes {dimension_semantics = [], scalar_prefetch = 0 : i64, scratch_operands = 0 : i64, tpu.core_type = #tpu.core_type<tc>} {
    %c0 = arith.constant 0 : index
    %c0_0 = arith.constant 0 : index
    %0 = vector.load %arg0[%c0, %c0_0] : memref<16x8xf32, #tpu.memory_space<vmem>>, vector<16x8xf32>
    %c0_1 = arith.constant 0 : index
    %c0_2 = arith.constant 0 : index
    %1 = vector.load %arg2[%c0_1, %c0_2] : memref<8x128xf32, #tpu.memory_space<vmem>>, vector<8x128xf32>
    %cst = arith.constant dense<0.000000e+00> : vector<16x128xf32>
    %2 = tpu.matmul %0, %1, %cst {dimension_numbers = #tpu.dot_dimension_numbers<[1], [0], [0], [1], [0, 0, 1, 1], [], []>} : vector<16x8xf32>, vector<8x128xf32>, vector<16x128xf32> -> vector<16x128xf32>
    %c0_3 = arith.constant 0 : index
    %c0_4 = arith.constant 0 : index
    %3 = vector.load %arg4[%c0_3, %c0_4] : memref<1x128xf32, #tpu.memory_space<vmem>>, vector<1x128xf32>
    %cst_5 = arith.constant dense<0.000000e+00> : vector<16x1xf32>
    %4 = tpu.matmul %2, %3, %cst_5 {dimension_numbers = #tpu.dot_dimension_numbers<[1], [1], [0], [0], [0, 0, 1, 0], [], []>} : vector<16x128xf32>, vector<1x128xf32>, vector<16x1xf32> -> vector<16x1xf32>
    %c0_6 = arith.constant 0 : index
    %c0_7 = arith.constant 0 : index
    %5 = vector.load %arg3[%c0_6, %c0_7] : memref<1x128xf32, #tpu.memory_space<vmem>>, vector<1x128xf32>
    %cst_8 = arith.constant dense<0.000000e+00> : vector<1x16xf32>
    %6 = tpu.matmul %5, %2, %cst_8 {dimension_numbers = #tpu.dot_dimension_numbers<[1], [1], [0], [0], [0, 0, 1, 0], [], []>} : vector<1x128xf32>, vector<16x128xf32>, vector<1x16xf32> -> vector<1x16xf32>
    %7 = vector.broadcast %4 : vector<16x1xf32> to vector<16x16xf32>
    %8 = vector.broadcast %6 : vector<1x16xf32> to vector<16x16xf32>
    %9 = arith.addf %7, %8 : vector<16x16xf32>
    %cst_9 = arith.constant 0.000000e+00 : f32
    %10 = vector.broadcast %cst_9 : f32 to vector<16x16xf32>
    %11 = arith.cmpf ogt, %9, %10 : vector<16x16xf32>
    %cst_10 = arith.constant 2.000000e-01 : f32
    %12 = vector.broadcast %cst_10 : f32 to vector<16x16xf32>
    %13 = arith.mulf %12, %9 : vector<16x16xf32>
    %14 = arith.select %11, %9, %13 : vector<16x16xi1>, vector<16x16xf32>
    %15 = tpu.iota {dimensions = array<i32: 0>} : vector<16x16xi32>
    %16 = tpu.iota {dimensions = array<i32: 1>} : vector<16x16xi32>
    %c0_11 = arith.constant 0 : index
    %c0_12 = arith.constant 0 : index
    %17 = vector.load %arg1[%c0_11, %c0_12] : memref<16x16xf32, #tpu.memory_space<vmem>>, vector<16x16xf32>
    %cst_13 = arith.constant 0.000000e+00 : f32
    %18 = vector.broadcast %cst_13 : f32 to vector<16x16xf32>
    %19 = arith.cmpf ogt, %17, %18 : vector<16x16xf32>
    %20 = arith.cmpi eq, %15, %16 : vector<16x16xi32>
    %21 = arith.ori %19, %20 : vector<16x16xi1>
    %cst_14 = arith.constant -1.000000e+30 : f32
    %22 = vector.broadcast %cst_14 : f32 to vector<16x16xf32>
    %23 = arith.select %21, %14, %22 : vector<16x16xi1>, vector<16x16xf32>
    %cst_15 = arith.constant dense<0xFF800000> : vector<16xf32>
    %24 = vector.multi_reduction <maximumf>, %23, %cst_15 [1] : vector<16x16xf32> to vector<16xf32>
    %25 = vector.shape_cast %24 : vector<16xf32> to vector<16x1xf32>
    %26 = vector.broadcast %25 : vector<16x1xf32> to vector<16x16xf32>
    %27 = arith.subf %23, %26 : vector<16x16xf32>
    %28 = math.exp %27 : vector<16x16xf32>
    %cst_16 = arith.constant dense<0.000000e+00> : vector<16xf32>
    %29 = vector.multi_reduction <add>, %28, %cst_16 [1] : vector<16x16xf32> to vector<16xf32>
    %30 = vector.shape_cast %29 : vector<16xf32> to vector<16x1xf32>
    %31 = tpu.reciprocal %30 {approx = true} : vector<16x1xf32> -> vector<16x1xf32>
    %32 = vector.broadcast %31 : vector<16x1xf32> to vector<16x16xf32>
    %33 = arith.mulf %28, %32 : vector<16x16xf32>
    %cst_17 = arith.constant dense<0.000000e+00> : vector<16x128xf32>
    %34 = tpu.matmul %33, %2, %cst_17 {dimension_numbers = #tpu.dot_dimension_numbers<[1], [0], [0], [1], [0, 0, 1, 1], [], []>} : vector<16x16xf32>, vector<16x128xf32>, vector<16x128xf32> -> vector<16x128xf32>
    %c0_18 = arith.constant 0 : index
    %c0_19 = arith.constant 0 : index
    %35 = vector.load %arg5[%c0_18, %c0_19] : memref<1x128xf32, #tpu.memory_space<vmem>>, vector<1x128xf32>
    %36 = vector.broadcast %35 : vector<1x128xf32> to vector<16x128xf32>
    %37 = arith.addf %34, %36 : vector<16x128xf32>
    %c0_20 = arith.constant 0 : index
    %c0_21 = arith.constant 0 : index
    %38 = vector.load %arg7[%c0_20, %c0_21] : memref<16x128xf32, #tpu.memory_space<vmem>>, vector<16x128xf32>
    tpu.vector_store %arg7[%c0_20, %c0_21], %37 {strides = array<i32>} : memref<16x128xf32, #tpu.memory_space<vmem>>, vector<16x128xf32>,
    %c0_22 = arith.constant 0 : index
    %c0_23 = arith.constant 0 : index
    %39 = vector.load %arg6[%c0_22, %c0_23] : memref<1x128xf32, #tpu.memory_space<vmem>>, vector<1x128xf32>
    %cst_24 = arith.constant dense<0.000000e+00> : vector<16x1xf32>
    %40 = tpu.matmul %37, %39, %cst_24 {dimension_numbers = #tpu.dot_dimension_numbers<[1], [1], [0], [0], [0, 0, 1, 0], [], []>} : vector<16x128xf32>, vector<1x128xf32>, vector<16x1xf32> -> vector<16x1xf32>
    %41 = arith.negf %40 : vector<16x1xf32>
    %42 = math.exp %41 : vector<16x1xf32>
    %cst_25 = arith.constant 1.000000e+00 : f32
    %43 = vector.broadcast %cst_25 : f32 to vector<16x1xf32>
    %44 = arith.addf %43, %42 : vector<16x1xf32>
    %45 = arith.divf %43, %44 : vector<16x1xf32>
    %c0_26 = arith.constant 0 : index
    %c0_27 = arith.constant 0 : index
    %46 = vector.load %arg8[%c0_26, %c0_27] : memref<16x1xf32, #tpu.memory_space<vmem>>, vector<16x1xf32>
    tpu.vector_store %arg8[%c0_26, %c0_27], %45 {strides = array<i32>} : memref<16x1xf32, #tpu.memory_space<vmem>>, vector<16x1xf32>,
    return
  }
}

module attributes {stable_mosaic.version = 11 : i64} {
  func.func @gat2_kernel(%arg0: memref<16x128xf32, #tpu.memory_space<vmem>>, %arg1: memref<8x1xi32, #tpu.memory_space<vmem>>, %arg2: memref<8x1xf32, #tpu.memory_space<vmem>>, %arg3: memref<16x16xf32, #tpu.memory_space<vmem>>, %arg4: memref<16x16xf32, #tpu.memory_space<vmem>>, %arg5: memref<128x16xf32, #tpu.memory_space<vmem>>, %arg6: memref<1x16xf32, #tpu.memory_space<vmem>>, %arg7: memref<1x16xf32, #tpu.memory_space<vmem>>, %arg8: memref<1x16xf32, #tpu.memory_space<vmem>>, %arg9: memref<1x16xf32, #tpu.memory_space<vmem>>, %arg10: memref<8x128xf32, #tpu.memory_space<vmem>>, %arg11: memref<8x16xf32, #tpu.memory_space<vmem>>, %arg12: memref<8x1xf32, #tpu.memory_space<vmem>>) attributes {dimension_semantics = [], scalar_prefetch = 0 : i64, scratch_operands = 0 : i64, tpu.core_type = #tpu.core_type<tc>} {
    %0 = tpu.iota {dimensions = array<i32: 1>} : vector<8x16xi32>
    %c0 = arith.constant 0 : index
    %c0_0 = arith.constant 0 : index
    %1 = vector.load %arg1[%c0, %c0_0] : memref<8x1xi32, #tpu.memory_space<vmem>>, vector<8x1xi32>
    %2 = vector.broadcast %1 : vector<8x1xi32> to vector<8x16xi32>
    %3 = arith.cmpi eq, %0, %2 : vector<8x16xi32>
    %cst = arith.constant 1.000000e+00 : f32
    %cst_1 = arith.constant 0.000000e+00 : f32
    %4 = vector.broadcast %cst : f32 to vector<8x16xf32>
    %5 = vector.broadcast %cst_1 : f32 to vector<8x16xf32>
    %6 = arith.select %3, %4, %5 : vector<8x16xi1>, vector<8x16xf32>
    %c0_2 = arith.constant 0 : index
    %c0_3 = arith.constant 0 : index
    %7 = vector.load %arg0[%c0_2, %c0_3] : memref<16x128xf32, #tpu.memory_space<vmem>>, vector<16x128xf32>
    %cst_4 = arith.constant dense<0.000000e+00> : vector<8x128xf32>
    %8 = tpu.matmul %6, %7, %cst_4 {dimension_numbers = #tpu.dot_dimension_numbers<[1], [0], [0], [1], [0, 0, 1, 1], [], []>} : vector<8x16xf32>, vector<16x128xf32>, vector<8x128xf32> -> vector<8x128xf32>
    %c0_5 = arith.constant 0 : index
    %c0_6 = arith.constant 0 : index
    %9 = vector.load %arg2[%c0_5, %c0_6] : memref<8x1xf32, #tpu.memory_space<vmem>>, vector<8x1xf32>
    %10 = vector.broadcast %9 : vector<8x1xf32> to vector<8x128xf32>
    %11 = arith.mulf %8, %10 : vector<8x128xf32>
    %c0_7 = arith.constant 0 : index
    %c0_8 = arith.constant 0 : index
    %12 = vector.load %arg10[%c0_7, %c0_8] : memref<8x128xf32, #tpu.memory_space<vmem>>, vector<8x128xf32>
    tpu.vector_store %arg10[%c0_7, %c0_8], %11 {strides = array<i32>} : memref<8x128xf32, #tpu.memory_space<vmem>>, vector<8x128xf32>,
    %c0_9 = arith.constant 0 : index
    %c0_10 = arith.constant 0 : index
    %13 = vector.load %arg3[%c0_9, %c0_10] : memref<16x16xf32, #tpu.memory_space<vmem>>, vector<16x16xf32>
    %cst_11 = arith.constant dense<0.000000e+00> : vector<8x16xf32>
    %14 = tpu.matmul %6, %13, %cst_11 {dimension_numbers = #tpu.dot_dimension_numbers<[1], [0], [0], [1], [0, 0, 1, 1], [], []>} : vector<8x16xf32>, vector<16x16xf32>, vector<8x16xf32> -> vector<8x16xf32>
    %cst_12 = arith.constant dense<0.000000e+00> : vector<8x8xf32>
    %15 = tpu.matmul %14, %6, %cst_12 {dimension_numbers = #tpu.dot_dimension_numbers<[1], [1], [0], [0], [0, 0, 1, 0], [], []>} : vector<8x16xf32>, vector<8x16xf32>, vector<8x8xf32> -> vector<8x8xf32>
    %c0_13 = arith.constant 0 : index
    %c0_14 = arith.constant 0 : index
    %16 = vector.load %arg4[%c0_13, %c0_14] : memref<16x16xf32, #tpu.memory_space<vmem>>, vector<16x16xf32>
    %cst_15 = arith.constant dense<0.000000e+00> : vector<8x16xf32>
    %17 = tpu.matmul %6, %16, %cst_15 {dimension_numbers = #tpu.dot_dimension_numbers<[1], [0], [0], [1], [0, 0, 1, 1], [], []>} : vector<8x16xf32>, vector<16x16xf32>, vector<8x16xf32> -> vector<8x16xf32>
    %cst_16 = arith.constant dense<0.000000e+00> : vector<8x8xf32>
    %18 = tpu.matmul %17, %6, %cst_16 {dimension_numbers = #tpu.dot_dimension_numbers<[1], [1], [0], [0], [0, 0, 1, 0], [], []>} : vector<8x16xf32>, vector<8x16xf32>, vector<8x8xf32> -> vector<8x8xf32>
    %19 = tpu.iota {dimensions = array<i32: 0>} : vector<8x8xi32>
    %20 = tpu.iota {dimensions = array<i32: 1>} : vector<8x8xi32>
    %21 = arith.cmpi eq, %19, %20 : vector<8x8xi32>
    %cst_17 = arith.constant 1.000000e+00 : f32
    %cst_18 = arith.constant 0.000000e+00 : f32
    %22 = vector.broadcast %cst_17 : f32 to vector<8x8xf32>
    %23 = vector.broadcast %cst_18 : f32 to vector<8x8xf32>
    %24 = arith.select %21, %22, %23 : vector<8x8xi1>, vector<8x8xf32>
    %cst_19 = arith.constant 0.000000e+00 : f32
    %25 = vector.broadcast %cst_19 : f32 to vector<8x8xf32>
    %26 = arith.cmpf ogt, %15, %25 : vector<8x8xf32>
    %cst_20 = arith.constant 0.000000e+00 : f32
    %27 = vector.broadcast %cst_20 : f32 to vector<8x8xf32>
    %28 = arith.select %26, %18, %27 : vector<8x8xi1>, vector<8x8xf32>
    %29 = arith.addf %28, %24 : vector<8x8xf32>
    %cst_21 = arith.constant dense<0.000000e+00> : vector<8x8xf32>
    %30 = tpu.matmul %29, %29, %cst_21 {dimension_numbers = #tpu.dot_dimension_numbers<[1], [0], [0], [1], [0, 0, 1, 1], [], []>} : vector<8x8xf32>, vector<8x8xf32>, vector<8x8xf32> -> vector<8x8xf32>
    %cst_22 = arith.constant 0.000000e+00 : f32
    %31 = vector.broadcast %cst_22 : f32 to vector<8x8xf32>
    %32 = arith.cmpf ogt, %30, %31 : vector<8x8xf32>
    %c0_23 = arith.constant 0 : index
    %c0_24 = arith.constant 0 : index
    %33 = vector.load %arg5[%c0_23, %c0_24] : memref<128x16xf32, #tpu.memory_space<vmem>>, vector<128x16xf32>
    %cst_25 = arith.constant dense<0.000000e+00> : vector<8x16xf32>
    %34 = tpu.matmul %11, %33, %cst_25 {dimension_numbers = #tpu.dot_dimension_numbers<[1], [0], [0], [1], [0, 0, 1, 1], [], []>} : vector<8x128xf32>, vector<128x16xf32>, vector<8x16xf32> -> vector<8x16xf32>
    %c0_26 = arith.constant 0 : index
    %c0_27 = arith.constant 0 : index
    %35 = vector.load %arg7[%c0_26, %c0_27] : memref<1x16xf32, #tpu.memory_space<vmem>>, vector<1x16xf32>
    %cst_28 = arith.constant dense<0.000000e+00> : vector<8x1xf32>
    %36 = tpu.matmul %34, %35, %cst_28 {dimension_numbers = #tpu.dot_dimension_numbers<[1], [1], [0], [0], [0, 0, 1, 0], [], []>} : vector<8x16xf32>, vector<1x16xf32>, vector<8x1xf32> -> vector<8x1xf32>
    %c0_29 = arith.constant 0 : index
    %c0_30 = arith.constant 0 : index
    %37 = vector.load %arg6[%c0_29, %c0_30] : memref<1x16xf32, #tpu.memory_space<vmem>>, vector<1x16xf32>
    %cst_31 = arith.constant dense<0.000000e+00> : vector<1x8xf32>
    %38 = tpu.matmul %37, %34, %cst_31 {dimension_numbers = #tpu.dot_dimension_numbers<[1], [1], [0], [0], [0, 0, 1, 0], [], []>} : vector<1x16xf32>, vector<8x16xf32>, vector<1x8xf32> -> vector<1x8xf32>
    %39 = vector.broadcast %36 : vector<8x1xf32> to vector<8x8xf32>
    %40 = vector.broadcast %38 : vector<1x8xf32> to vector<8x8xf32>
    %41 = arith.addf %39, %40 : vector<8x8xf32>
    %cst_32 = arith.constant 0.000000e+00 : f32
    %42 = vector.broadcast %cst_32 : f32 to vector<8x8xf32>
    %43 = arith.cmpf ogt, %41, %42 : vector<8x8xf32>
    %cst_33 = arith.constant 2.000000e-01 : f32
    %44 = vector.broadcast %cst_33 : f32 to vector<8x8xf32>
    %45 = arith.mulf %44, %41 : vector<8x8xf32>
    %46 = arith.select %43, %41, %45 : vector<8x8xi1>, vector<8x8xf32>
    %cst_34 = arith.constant -1.000000e+30 : f32
    %47 = vector.broadcast %cst_34 : f32 to vector<8x8xf32>
    %48 = arith.select %32, %46, %47 : vector<8x8xi1>, vector<8x8xf32>
    %cst_35 = arith.constant dense<0xFF800000> : vector<8xf32>
    %49 = vector.multi_reduction <maximumf>, %48, %cst_35 [1] : vector<8x8xf32> to vector<8xf32>
    %50 = vector.shape_cast %49 : vector<8xf32> to vector<8x1xf32>
    %51 = vector.broadcast %50 : vector<8x1xf32> to vector<8x8xf32>
    %52 = arith.subf %48, %51 : vector<8x8xf32>
    %53 = math.exp %52 : vector<8x8xf32>
    %cst_36 = arith.constant dense<0.000000e+00> : vector<8xf32>
    %54 = vector.multi_reduction <add>, %53, %cst_36 [1] : vector<8x8xf32> to vector<8xf32>
    %55 = vector.shape_cast %54 : vector<8xf32> to vector<8x1xf32>
    %56 = tpu.reciprocal %55 {approx = true} : vector<8x1xf32> -> vector<8x1xf32>
    %57 = vector.broadcast %56 : vector<8x1xf32> to vector<8x8xf32>
    %58 = arith.mulf %53, %57 : vector<8x8xf32>
    %cst_37 = arith.constant dense<0.000000e+00> : vector<8x16xf32>
    %59 = tpu.matmul %58, %34, %cst_37 {dimension_numbers = #tpu.dot_dimension_numbers<[1], [0], [0], [1], [0, 0, 1, 1], [], []>} : vector<8x8xf32>, vector<8x16xf32>, vector<8x16xf32> -> vector<8x16xf32>
    %c0_38 = arith.constant 0 : index
    %c0_39 = arith.constant 0 : index
    %60 = vector.load %arg8[%c0_38, %c0_39] : memref<1x16xf32, #tpu.memory_space<vmem>>, vector<1x16xf32>
    %61 = vector.broadcast %60 : vector<1x16xf32> to vector<8x16xf32>
    %62 = arith.addf %59, %61 : vector<8x16xf32>
    %c0_40 = arith.constant 0 : index
    %c0_41 = arith.constant 0 : index
    %63 = vector.load %arg11[%c0_40, %c0_41] : memref<8x16xf32, #tpu.memory_space<vmem>>, vector<8x16xf32>
    tpu.vector_store %arg11[%c0_40, %c0_41], %62 {strides = array<i32>} : memref<8x16xf32, #tpu.memory_space<vmem>>, vector<8x16xf32>,
    %c0_42 = arith.constant 0 : index
    %c0_43 = arith.constant 0 : index
    %64 = vector.load %arg9[%c0_42, %c0_43] : memref<1x16xf32, #tpu.memory_space<vmem>>, vector<1x16xf32>
    %cst_44 = arith.constant dense<0.000000e+00> : vector<8x1xf32>
    %65 = tpu.matmul %62, %64, %cst_44 {dimension_numbers = #tpu.dot_dimension_numbers<[1], [1], [0], [0], [0, 0, 1, 0], [], []>} : vector<8x16xf32>, vector<1x16xf32>, vector<8x1xf32> -> vector<8x1xf32>
    %66 = arith.negf %65 : vector<8x1xf32>
    %67 = math.exp %66 : vector<8x1xf32>
    %cst_45 = arith.constant 1.000000e+00 : f32
    %68 = vector.broadcast %cst_45 : f32 to vector<8x1xf32>
    %69 = arith.addf %68, %67 : vector<8x1xf32>
    %70 = arith.divf %68, %69 : vector<8x1xf32>
    %c0_46 = arith.constant 0 : index
    %c0_47 = arith.constant 0 : index
    %71 = vector.load %arg12[%c0_46, %c0_47] : memref<8x1xf32, #tpu.memory_space<vmem>>, vector<8x1xf32>
    tpu.vector_store %arg12[%c0_46, %c0_47], %70 {strides = array<i32>} : memref<8x1xf32, #tpu.memory_space<vmem>>, vector<8x1xf32>,
    return
  }
}

module attributes {stable_mosaic.version = 11 : i64} {
  func.func @kernel(%arg0: memref<8x128xf32, #tpu.memory_space<vmem>>, %arg1: memref<8x16xf32, #tpu.memory_space<vmem>>, %arg2: memref<4x1xi32, #tpu.memory_space<vmem>>, %arg3: memref<4x1xf32, #tpu.memory_space<vmem>>, %arg4: memref<128x16xf32, #tpu.memory_space<vmem>>, %arg5: memref<128x16xf32, #tpu.memory_space<vmem>>, %arg6: memref<16x16xf32, #tpu.memory_space<vmem>>, %arg7: memref<16x16xf32, #tpu.memory_space<vmem>>, %arg8: memref<1x16xf32, #tpu.memory_space<vmem>>, %arg9: memref<16x16xf32, #tpu.memory_space<vmem>>, %arg10: memref<1x16xf32, #tpu.memory_space<vmem>>, %arg11: memref<16x2xf32, #tpu.memory_space<vmem>>, %arg12: memref<1x2xf32, #tpu.memory_space<vmem>>, %arg13: memref<2x2xf32, #tpu.memory_space<vmem>>) attributes {dimension_semantics = [], scalar_prefetch = 0 : i64, scratch_operands = 0 : i64, tpu.core_type = #tpu.core_type<tc>} {
    %0 = tpu.iota {dimensions = array<i32: 1>} : vector<4x8xi32>
    %c0 = arith.constant 0 : index
    %c0_0 = arith.constant 0 : index
    %1 = vector.load %arg2[%c0, %c0_0] : memref<4x1xi32, #tpu.memory_space<vmem>>, vector<4x1xi32>
    %2 = vector.broadcast %1 : vector<4x1xi32> to vector<4x8xi32>
    %3 = arith.cmpi eq, %0, %2 : vector<4x8xi32>
    %cst = arith.constant 1.000000e+00 : f32
    %cst_1 = arith.constant 0.000000e+00 : f32
    %4 = vector.broadcast %cst : f32 to vector<4x8xf32>
    %5 = vector.broadcast %cst_1 : f32 to vector<4x8xf32>
    %6 = arith.select %3, %4, %5 : vector<4x8xi1>, vector<4x8xf32>
    %c0_2 = arith.constant 0 : index
    %c0_3 = arith.constant 0 : index
    %7 = vector.load %arg1[%c0_2, %c0_3] : memref<8x16xf32, #tpu.memory_space<vmem>>, vector<8x16xf32>
    %cst_4 = arith.constant dense<0.000000e+00> : vector<4x16xf32>
    %8 = tpu.matmul %6, %7, %cst_4 {dimension_numbers = #tpu.dot_dimension_numbers<[1], [0], [0], [1], [0, 0, 1, 1], [], []>} : vector<4x8xf32>, vector<8x16xf32>, vector<4x16xf32> -> vector<4x16xf32>
    %c0_5 = arith.constant 0 : index
    %c0_6 = arith.constant 0 : index
    %9 = vector.load %arg3[%c0_5, %c0_6] : memref<4x1xf32, #tpu.memory_space<vmem>>, vector<4x1xf32>
    %10 = vector.broadcast %9 : vector<4x1xf32> to vector<4x16xf32>
    %11 = arith.mulf %8, %10 : vector<4x16xf32>
    %c0_7 = arith.constant 0 : index
    %c0_8 = arith.constant 0 : index
    %12 = vector.load %arg0[%c0_7, %c0_8] : memref<8x128xf32, #tpu.memory_space<vmem>>, vector<4x128xf32>
    %13 = vector.extract_strided_slice %11 {offsets = [0, 0], sizes = [2, 16], strides = [1, 1]} : vector<4x16xf32> to vector<2x16xf32>
    %cst_9 = arith.constant dense<0xFF800000> : vector<128xf32>
    %14 = vector.multi_reduction <maximumf>, %12, %cst_9 [0] : vector<4x128xf32> to vector<128xf32>
    %15 = vector.shape_cast %14 : vector<128xf32> to vector<1x128xf32>
    %cst_10 = arith.constant dense<0.000000e+00> : vector<128xf32>
    %16 = vector.multi_reduction <add>, %12, %cst_10 [0] : vector<4x128xf32> to vector<128xf32>
    %17 = vector.shape_cast %16 : vector<128xf32> to vector<1x128xf32>
    %cst_11 = arith.constant 4.000000e+00 : f32
    %18 = vector.broadcast %cst_11 : f32 to vector<1x128xf32>
    %19 = arith.divf %17, %18 : vector<1x128xf32>
    %cst_12 = arith.constant dense<0xFF800000> : vector<16xf32>
    %20 = vector.multi_reduction <maximumf>, %13, %cst_12 [0] : vector<2x16xf32> to vector<16xf32>
    %21 = vector.shape_cast %20 : vector<16xf32> to vector<1x16xf32>
    %cst_13 = arith.constant dense<0.000000e+00> : vector<16xf32>
    %22 = vector.multi_reduction <add>, %13, %cst_13 [0] : vector<2x16xf32> to vector<16xf32>
    %23 = vector.shape_cast %22 : vector<16xf32> to vector<1x16xf32>
    %cst_14 = arith.constant 2.000000e+00 : f32
    %24 = vector.broadcast %cst_14 : f32 to vector<1x16xf32>
    %25 = arith.divf %23, %24 : vector<1x16xf32>
    %c0_15 = arith.constant 0 : index
    %c0_16 = arith.constant 0 : index
    %26 = vector.load %arg4[%c0_15, %c0_16] : memref<128x16xf32, #tpu.memory_space<vmem>>, vector<128x16xf32>
    %cst_17 = arith.constant dense<0.000000e+00> : vector<1x16xf32>
    %27 = tpu.matmul %15, %26, %cst_17 {dimension_numbers = #tpu.dot_dimension_numbers<[1], [0], [0], [1], [0, 0, 1, 1], [], []>} : vector<1x128xf32>, vector<128x16xf32>, vector<1x16xf32> -> vector<1x16xf32>
    %c0_18 = arith.constant 0 : index
    %c0_19 = arith.constant 0 : index
    %28 = vector.load %arg5[%c0_18, %c0_19] : memref<128x16xf32, #tpu.memory_space<vmem>>, vector<128x16xf32>
    %cst_20 = arith.constant dense<0.000000e+00> : vector<1x16xf32>
    %29 = tpu.matmul %19, %28, %cst_20 {dimension_numbers = #tpu.dot_dimension_numbers<[1], [0], [0], [1], [0, 0, 1, 1], [], []>} : vector<1x128xf32>, vector<128x16xf32>, vector<1x16xf32> -> vector<1x16xf32>
    %30 = arith.addf %27, %29 : vector<1x16xf32>
    %c0_21 = arith.constant 0 : index
    %c0_22 = arith.constant 0 : index
    %31 = vector.load %arg6[%c0_21, %c0_22] : memref<16x16xf32, #tpu.memory_space<vmem>>, vector<16x16xf32>
    %cst_23 = arith.constant dense<0.000000e+00> : vector<1x16xf32>
    %32 = tpu.matmul %21, %31, %cst_23 {dimension_numbers = #tpu.dot_dimension_numbers<[1], [0], [0], [1], [0, 0, 1, 1], [], []>} : vector<1x16xf32>, vector<16x16xf32>, vector<1x16xf32> -> vector<1x16xf32>
    %33 = arith.addf %30, %32 : vector<1x16xf32>
    %c0_24 = arith.constant 0 : index
    %c0_25 = arith.constant 0 : index
    %34 = vector.load %arg7[%c0_24, %c0_25] : memref<16x16xf32, #tpu.memory_space<vmem>>, vector<16x16xf32>
    %cst_26 = arith.constant dense<0.000000e+00> : vector<1x16xf32>
    %35 = tpu.matmul %25, %34, %cst_26 {dimension_numbers = #tpu.dot_dimension_numbers<[1], [0], [0], [1], [0, 0, 1, 1], [], []>} : vector<1x16xf32>, vector<16x16xf32>, vector<1x16xf32> -> vector<1x16xf32>
    %36 = arith.addf %33, %35 : vector<1x16xf32>
    %c0_27 = arith.constant 0 : index
    %c0_28 = arith.constant 0 : index
    %37 = vector.load %arg8[%c0_27, %c0_28] : memref<1x16xf32, #tpu.memory_space<vmem>>, vector<1x16xf32>
    %38 = arith.addf %36, %37 : vector<1x16xf32>
    %cst_29 = arith.constant 0.000000e+00 : f32
    %39 = vector.broadcast %cst_29 : f32 to vector<1x16xf32>
    %40 = arith.maximumf %38, %39 : vector<1x16xf32>
    %c0_30 = arith.constant 0 : index
    %c0_31 = arith.constant 0 : index
    %41 = vector.load %arg9[%c0_30, %c0_31] : memref<16x16xf32, #tpu.memory_space<vmem>>, vector<16x16xf32>
    %cst_32 = arith.constant dense<0.000000e+00> : vector<1x16xf32>
    %42 = tpu.matmul %40, %41, %cst_32 {dimension_numbers = #tpu.dot_dimension_numbers<[1], [0], [0], [1], [0, 0, 1, 1], [], []>} : vector<1x16xf32>, vector<16x16xf32>, vector<1x16xf32> -> vector<1x16xf32>
    %c0_33 = arith.constant 0 : index
    %c0_34 = arith.constant 0 : index
    %43 = vector.load %arg10[%c0_33, %c0_34] : memref<1x16xf32, #tpu.memory_space<vmem>>, vector<1x16xf32>
    %44 = arith.addf %42, %43 : vector<1x16xf32>
    %cst_35 = arith.constant 0.000000e+00 : f32
    %45 = vector.broadcast %cst_35 : f32 to vector<1x16xf32>
    %46 = arith.maximumf %44, %45 : vector<1x16xf32>
    %c0_36 = arith.constant 0 : index
    %c0_37 = arith.constant 0 : index
    %47 = vector.load %arg11[%c0_36, %c0_37] : memref<16x2xf32, #tpu.memory_space<vmem>>, vector<16x2xf32>
    %cst_38 = arith.constant dense<0.000000e+00> : vector<1x2xf32>
    %48 = tpu.matmul %46, %47, %cst_38 {dimension_numbers = #tpu.dot_dimension_numbers<[1], [0], [0], [1], [0, 0, 1, 1], [], []>} : vector<1x16xf32>, vector<16x2xf32>, vector<1x2xf32> -> vector<1x2xf32>
    %c0_39 = arith.constant 0 : index
    %c0_40 = arith.constant 0 : index
    %49 = vector.load %arg12[%c0_39, %c0_40] : memref<1x2xf32, #tpu.memory_space<vmem>>, vector<1x2xf32>
    %50 = arith.addf %48, %49 : vector<1x2xf32>
    %cst_41 = arith.constant dense<0xFF800000> : vector<1xf32>
    %51 = vector.multi_reduction <maximumf>, %50, %cst_41 [1] : vector<1x2xf32> to vector<1xf32>
    %52 = vector.shape_cast %51 : vector<1xf32> to vector<1x1xf32>
    %53 = vector.broadcast %52 : vector<1x1xf32> to vector<1x2xf32>
    %54 = arith.subf %50, %53 : vector<1x2xf32>
    %55 = math.exp %54 : vector<1x2xf32>
    %cst_42 = arith.constant dense<0.000000e+00> : vector<1xf32>
    %56 = vector.multi_reduction <add>, %55, %cst_42 [1] : vector<1x2xf32> to vector<1xf32>
    %57 = vector.shape_cast %56 : vector<1xf32> to vector<1x1xf32>
    %58 = math.log %57 : vector<1x1xf32>
    %59 = arith.addf %52, %58 : vector<1x1xf32>
    %60 = vector.broadcast %59 : vector<1x1xf32> to vector<1x2xf32>
    %61 = arith.subf %50, %60 : vector<1x2xf32>
    %c0_43 = arith.constant 0 : index
    %c0_44 = arith.constant 0 : index
    %62 = vector.load %arg13[%c0_43, %c0_44] : memref<2x2xf32, #tpu.memory_space<vmem>>, vector<1x2xf32>
    tpu.vector_store %arg13[%c0_43, %c0_44], %61 {strides = array<i32>} : memref<2x2xf32, #tpu.memory_space<vmem>>, vector<1x2xf32>,
    %c4 = arith.constant 4 : index
    %c0_45 = arith.constant 0 : index
    %63 = vector.load %arg0[%c4, %c0_45] : memref<8x128xf32, #tpu.memory_space<vmem>>, vector<4x128xf32>
    %64 = vector.extract_strided_slice %11 {offsets = [2, 0], sizes = [2, 16], strides = [1, 1]} : vector<4x16xf32> to vector<2x16xf32>
    %cst_46 = arith.constant dense<0xFF800000> : vector<128xf32>
    %65 = vector.multi_reduction <maximumf>, %63, %cst_46 [0] : vector<4x128xf32> to vector<128xf32>
    %66 = vector.shape_cast %65 : vector<128xf32> to vector<1x128xf32>
    %cst_47 = arith.constant dense<0.000000e+00> : vector<128xf32>
    %67 = vector.multi_reduction <add>, %63, %cst_47 [0] : vector<4x128xf32> to vector<128xf32>
    %68 = vector.shape_cast %67 : vector<128xf32> to vector<1x128xf32>
    %cst_48 = arith.constant 4.000000e+00 : f32
    %69 = vector.broadcast %cst_48 : f32 to vector<1x128xf32>
    %70 = arith.divf %68, %69 : vector<1x128xf32>
    %cst_49 = arith.constant dense<0xFF800000> : vector<16xf32>
    %71 = vector.multi_reduction <maximumf>, %64, %cst_49 [0] : vector<2x16xf32> to vector<16xf32>
    %72 = vector.shape_cast %71 : vector<16xf32> to vector<1x16xf32>
    %cst_50 = arith.constant dense<0.000000e+00> : vector<16xf32>
    %73 = vector.multi_reduction <add>, %64, %cst_50 [0] : vector<2x16xf32> to vector<16xf32>
    %74 = vector.shape_cast %73 : vector<16xf32> to vector<1x16xf32>
    %cst_51 = arith.constant 2.000000e+00 : f32
    %75 = vector.broadcast %cst_51 : f32 to vector<1x16xf32>
    %76 = arith.divf %74, %75 : vector<1x16xf32>
    %c0_52 = arith.constant 0 : index
    %c0_53 = arith.constant 0 : index
    %77 = vector.load %arg4[%c0_52, %c0_53] : memref<128x16xf32, #tpu.memory_space<vmem>>, vector<128x16xf32>
    %cst_54 = arith.constant dense<0.000000e+00> : vector<1x16xf32>
    %78 = tpu.matmul %66, %77, %cst_54 {dimension_numbers = #tpu.dot_dimension_numbers<[1], [0], [0], [1], [0, 0, 1, 1], [], []>} : vector<1x128xf32>, vector<128x16xf32>, vector<1x16xf32> -> vector<1x16xf32>
    %c0_55 = arith.constant 0 : index
    %c0_56 = arith.constant 0 : index
    %79 = vector.load %arg5[%c0_55, %c0_56] : memref<128x16xf32, #tpu.memory_space<vmem>>, vector<128x16xf32>
    %cst_57 = arith.constant dense<0.000000e+00> : vector<1x16xf32>
    %80 = tpu.matmul %70, %79, %cst_57 {dimension_numbers = #tpu.dot_dimension_numbers<[1], [0], [0], [1], [0, 0, 1, 1], [], []>} : vector<1x128xf32>, vector<128x16xf32>, vector<1x16xf32> -> vector<1x16xf32>
    %81 = arith.addf %78, %80 : vector<1x16xf32>
    %c0_58 = arith.constant 0 : index
    %c0_59 = arith.constant 0 : index
    %82 = vector.load %arg6[%c0_58, %c0_59] : memref<16x16xf32, #tpu.memory_space<vmem>>, vector<16x16xf32>
    %cst_60 = arith.constant dense<0.000000e+00> : vector<1x16xf32>
    %83 = tpu.matmul %72, %82, %cst_60 {dimension_numbers = #tpu.dot_dimension_numbers<[1], [0], [0], [1], [0, 0, 1, 1], [], []>} : vector<1x16xf32>, vector<16x16xf32>, vector<1x16xf32> -> vector<1x16xf32>
    %84 = arith.addf %81, %83 : vector<1x16xf32>
    %c0_61 = arith.constant 0 : index
    %c0_62 = arith.constant 0 : index
    %85 = vector.load %arg7[%c0_61, %c0_62] : memref<16x16xf32, #tpu.memory_space<vmem>>, vector<16x16xf32>
    %cst_63 = arith.constant dense<0.000000e+00> : vector<1x16xf32>
    %86 = tpu.matmul %76, %85, %cst_63 {dimension_numbers = #tpu.dot_dimension_numbers<[1], [0], [0], [1], [0, 0, 1, 1], [], []>} : vector<1x16xf32>, vector<16x16xf32>, vector<1x16xf32> -> vector<1x16xf32>
    %87 = arith.addf %84, %86 : vector<1x16xf32>
    %c0_64 = arith.constant 0 : index
    %c0_65 = arith.constant 0 : index
    %88 = vector.load %arg8[%c0_64, %c0_65] : memref<1x16xf32, #tpu.memory_space<vmem>>, vector<1x16xf32>
    %89 = arith.addf %87, %88 : vector<1x16xf32>
    %cst_66 = arith.constant 0.000000e+00 : f32
    %90 = vector.broadcast %cst_66 : f32 to vector<1x16xf32>
    %91 = arith.maximumf %89, %90 : vector<1x16xf32>
    %c0_67 = arith.constant 0 : index
    %c0_68 = arith.constant 0 : index
    %92 = vector.load %arg9[%c0_67, %c0_68] : memref<16x16xf32, #tpu.memory_space<vmem>>, vector<16x16xf32>
    %cst_69 = arith.constant dense<0.000000e+00> : vector<1x16xf32>
    %93 = tpu.matmul %91, %92, %cst_69 {dimension_numbers = #tpu.dot_dimension_numbers<[1], [0], [0], [1], [0, 0, 1, 1], [], []>} : vector<1x16xf32>, vector<16x16xf32>, vector<1x16xf32> -> vector<1x16xf32>
    %c0_70 = arith.constant 0 : index
    %c0_71 = arith.constant 0 : index
    %94 = vector.load %arg10[%c0_70, %c0_71] : memref<1x16xf32, #tpu.memory_space<vmem>>, vector<1x16xf32>
    %95 = arith.addf %93, %94 : vector<1x16xf32>
    %cst_72 = arith.constant 0.000000e+00 : f32
    %96 = vector.broadcast %cst_72 : f32 to vector<1x16xf32>
    %97 = arith.maximumf %95, %96 : vector<1x16xf32>
    %c0_73 = arith.constant 0 : index
    %c0_74 = arith.constant 0 : index
    %98 = vector.load %arg11[%c0_73, %c0_74] : memref<16x2xf32, #tpu.memory_space<vmem>>, vector<16x2xf32>
    %cst_75 = arith.constant dense<0.000000e+00> : vector<1x2xf32>
    %99 = tpu.matmul %97, %98, %cst_75 {dimension_numbers = #tpu.dot_dimension_numbers<[1], [0], [0], [1], [0, 0, 1, 1], [], []>} : vector<1x16xf32>, vector<16x2xf32>, vector<1x2xf32> -> vector<1x2xf32>
    %c0_76 = arith.constant 0 : index
    %c0_77 = arith.constant 0 : index
    %100 = vector.load %arg12[%c0_76, %c0_77] : memref<1x2xf32, #tpu.memory_space<vmem>>, vector<1x2xf32>
    %101 = arith.addf %99, %100 : vector<1x2xf32>
    %cst_78 = arith.constant dense<0xFF800000> : vector<1xf32>
    %102 = vector.multi_reduction <maximumf>, %101, %cst_78 [1] : vector<1x2xf32> to vector<1xf32>
    %103 = vector.shape_cast %102 : vector<1xf32> to vector<1x1xf32>
    %104 = vector.broadcast %103 : vector<1x1xf32> to vector<1x2xf32>
    %105 = arith.subf %101, %104 : vector<1x2xf32>
    %106 = math.exp %105 : vector<1x2xf32>
    %cst_79 = arith.constant dense<0.000000e+00> : vector<1xf32>
    %107 = vector.multi_reduction <add>, %106, %cst_79 [1] : vector<1x2xf32> to vector<1xf32>
    %108 = vector.shape_cast %107 : vector<1xf32> to vector<1x1xf32>
    %109 = math.log %108 : vector<1x1xf32>
    %110 = arith.addf %103, %109 : vector<1x1xf32>
    %111 = vector.broadcast %110 : vector<1x1xf32> to vector<1x2xf32>
    %112 = arith.subf %101, %111 : vector<1x2xf32>
    %c1 = arith.constant 1 : index
    %c0_80 = arith.constant 0 : index
    %113 = vector.load %arg13[%c1, %c0_80] : memref<2x2xf32, #tpu.memory_space<vmem>>, vector<1x2xf32>
    tpu.vector_store %arg13[%c1, %c0_80], %112 {strides = array<i32>} : memref<2x2xf32, #tpu.memory_space<vmem>>, vector<1x2xf32>,
    return
  }
}

</mosaic_0001>

<llo_original>
// kernel: squeeze.5
$region0: #{squeeze.5}
  %s0 = inlined_call_operand.vmem [shape: f32[16], index: 0, kind: input, shape index: {}]
  %s1 = inlined_call_operand.vmem [shape: f32[2,8], index: 1, kind: output, shape index: {}]
  $region1: #{squeeze.5} parent=0
    #allocation0 [shape = 'u8[4096]{0}', space=vmem, size = 0x1000, scoped, tag = 'scoped mem for output reshape']
    #allocation1 [shape = 'u8[4096]{0}', space=vmem, size = 0x1000, scoped, tag = 'scoped mem for input reshape']
    %s3 = ssub.s32 2, 1
    %v4 = vld [vmem:[%s0] sm:%s3]
    %5 = vst [vmem:[#allocation1] sm:%s3] %v4
    %v6 = vld [vmem:[#allocation1] sm:$0x1]
    %vm7 = vcmask 64512
    %8 = vst.msk [vmem:[#allocation0] sm:$0x1] %vm7, %v6
    %v9 = vld [vmem:[#allocation1] sm:$0x1]
    %10 = vrot.lane.b32.xlu0 %v9, 120
    %v11 = vpop.permute.xlu0 %10
    %vm12 = vcmask 64512
    %s13 = scalar_lea.vmem [#allocation0], 1
    %14 = vst.msk [vmem:[%s13] sm:$0x1] %vm12, %v11
    %s16 = ssub.s32 4, 1
    %v17 = vld [vmem:[#allocation0] sm:%s16]
    %s19 = ssub.s32 4, 1
    %20 = vst [vmem:[%s1] sm:%s19] %v17

// kernel: squeeze.7
$region0: #{squeeze.7}
  %s0 = inlined_call_operand.vmem [shape: f32[8], index: 0, kind: input, shape index: {}]
  %s1 = inlined_call_operand.vmem [shape: f32[2,4], index: 1, kind: output, shape index: {}]
  $region1: #{squeeze.7} parent=0
    #allocation0 [shape = 'u8[4096]{0}', space=vmem, size = 0x1000, scoped, tag = 'scoped mem for output reshape']
    #allocation1 [shape = 'u8[4096]{0}', space=vmem, size = 0x1000, scoped, tag = 'scoped mem for input reshape']
    %s3 = ssub.s32 2, 1
    %v4 = vld [vmem:[%s0] sm:%s3]
    %5 = vst [vmem:[#allocation1] sm:%s3] %v4
    %v6 = vld [vmem:[#allocation1] sm:$0x1]
    %vm7 = vcmask 31744
    %8 = vst.msk [vmem:[#allocation0] sm:$0x1] %vm7, %v6
    %v9 = vld [vmem:[#allocation1] sm:$0x1]
    %10 = vrot.lane.b32.xlu0 %v9, 124
    %v11 = vpop.permute.xlu0 %10
    %vm12 = vcmask 31744
    %s13 = scalar_lea.vmem [#allocation0], 1
    %14 = vst.msk [vmem:[%s13] sm:$0x1] %vm12, %v11
    %s16 = ssub.s32 4, 1
    %v17 = vld [vmem:[#allocation0] sm:%s16]
    %s19 = ssub.s32 4, 1
    %20 = vst [vmem:[%s1] sm:%s19] %v17

// kernel: nngat_forward.3
$region0: #{nngat_forward.3}
  #allocation0 [shape = 'u32[]', space=smem, size = 0x4, offset = 0x4, fixed_abs, tag = 'smem constant byte address 0x4 - core index']
  #allocation1 [shape = 'u32[72,128]{1,0:T(1,128)}', space=vmem, size = 0x9000, scoped, tag = 'internal scratch']
  %s0 = inlined_call_operand.vmem [shape: f32[16,8], index: 0, kind: input, shape index: {}]
  %s1 = inlined_call_operand.vmem [shape: f32[16,16], index: 1, kind: input, shape index: {}]
  %s2 = inlined_call_operand.vmem [shape: f32[8,128], index: 2, kind: input, shape index: {}]
  %s3 = inlined_call_operand.vmem [shape: f32[1,128], index: 3, kind: input, shape index: {}]
  %s4 = inlined_call_operand.vmem [shape: f32[1,128], index: 4, kind: input, shape index: {}]
  %s5 = inlined_call_operand.vmem [shape: f32[1,128], index: 5, kind: input, shape index: {}]
  %s6 = inlined_call_operand.vmem [shape: f32[1,128], index: 6, kind: input, shape index: {}]
  %s7 = inlined_call_operand.vmem [shape: f32[16,128], index: 7, kind: output, shape index: {0}]
  %s8 = inlined_call_operand.vmem [shape: f32[16,1], index: 8, kind: output, shape index: {1}]
  %9 = xla_tuple %s7, %s8
  %s10 = sld [smem:[#allocation0]]
  $region46: #{nngat_forward.3} parent=0
    _
  %s12 = ssub.s32 1, %s10
  %s13 = scalar_select 0, %s12, %s10
  // Predicated region
  $region2: #{nngat_forward.3} parent=0 // pred_check
    _
  $region3: #{nngat_forward.3} parent=0 // pred_check_branch
    %15 = sbr.rel (0) target = $region5
  $region4: #{nngat_forward.3} parent=0 // pred_region
    _
  $region5: #{nngat_forward.3} parent=0 // pred_fallthru
    _
  // Predicated region
  $region6: #{nngat_forward.3} parent=0 // pred_check
    _
  $region7: #{nngat_forward.3} parent=0 // pred_check_branch
    %17 = sbr.rel (0) target = $region9
  $region8: #{nngat_forward.3} parent=0 // pred_region
    _
  $region9: #{nngat_forward.3} parent=0 // pred_fallthru
    _
  // Predicated region
  $region10: #{nngat_forward.3} parent=0 // pred_check
    _
  $region11: #{nngat_forward.3} parent=0 // pred_check_branch
    %19 = sbr.rel (0) target = $region13
  $region12: #{nngat_forward.3} parent=0 // pred_region
    _
  $region13: #{nngat_forward.3} parent=0 // pred_fallthru
    _
  // Predicated region
  $region14: #{nngat_forward.3} parent=0 // pred_check
    _
  $region15: #{nngat_forward.3} parent=0 // pred_check_branch
    %21 = sbr.rel (0) target = $region17
  $region16: #{nngat_forward.3} parent=0 // pred_region
    _
  $region17: #{nngat_forward.3} parent=0 // pred_fallthru
    _
  // Predicated region
  $region18: #{nngat_forward.3} parent=0 // pred_check
    _
  $region19: #{nngat_forward.3} parent=0 // pred_check_branch
    %23 = sbr.rel (0) target = $region21
  $region20: #{nngat_forward.3} parent=0 // pred_region
    _
  $region21: #{nngat_forward.3} parent=0 // pred_fallthru
    _
  // Predicated region
  $region22: #{nngat_forward.3} parent=0 // pred_check
    _
  $region23: #{nngat_forward.3} parent=0 // pred_check_branch
    %25 = sbr.rel (0) target = $region25
  $region24: #{nngat_forward.3} parent=0 // pred_region
    _
  $region25: #{nngat_forward.3} parent=0 // pred_fallthru
    _
  // Predicated region
  $region26: #{nngat_forward.3} parent=0 // pred_check
    _
  $region27: #{nngat_forward.3} parent=0 // pred_check_branch
    %27 = sbr.rel (0) target = $region29
  $region28: #{nngat_forward.3} parent=0 // pred_region
    _
  $region29: #{nngat_forward.3} parent=0 // pred_fallthru
    _
  %v28 = vld [vmem:[%s0] sm:$0xff]
  %v29 = vld [vmem:[%s0 + $0x8] sm:$0xff]
  %v30 = vld [vmem:[%s2] sm:$0xff]
  %vm31 = vcmask 64512
  %v33 = vsel %vm31, %v28, 0
  %v36 = vsel %vm31, %v29, 0
  %38 = vmatpush.msra.mxu0 0.0
  %39 = vmatpush.msra.mxu0 0.0
  %40 = vmatpush.msra.mxu0 0.0
  %41 = vmatpush.msra.mxu0 0.0
  %42 = vmatpush.msra.mxu0 0.0
  %43 = vmatpush.msra.mxu0 0.0
  %44 = vmatpush.msra.mxu0 0.0
  %45 = vmatpush.msra.mxu0 0.0
  %46 = vmatpush.msra.mxu0 0.0
  %47 = vmatpush.msra.mxu0 0.0
  %48 = vmatpush.msra.mxu0 0.0
  %49 = vmatpush.msra.mxu0 0.0
  %50 = vmatpush.msra.mxu0 0.0
  %51 = vmatpush.msra.mxu0 0.0
  %52 = vmatpush.msra.mxu0 0.0
  %53 = vmatpush.msra.mxu0 %v30
  %54 = vmatmul.f32.gmra.mxu0 %v33
  %v55 = vpop.f32.mrf.mxu0
  %v56 = vadd.f32 0.0, %v55
  %57 = vmatmul.f32.gmra.mxu0 %v36
  %v58 = vpop.f32.mrf.mxu0
  %v59 = vadd.f32 0.0, %v58
  %60 = vdwg.mxu0
  %v61 = vld [vmem:[%s4] sm:$0x1]
  %v63 = vperm.slane %v61, 0
  %v65 = vmul.f32 %v56, %v63
  %v66 = vmul.f32 %v59, %v63
  %67 = vadd.xlane.f32.xlu0 %v65
  %v68 = vpop.xlane.xlu0 %67
  %69 = vadd.xlane.f32.xlu0 %v66
  %v70 = vpop.xlane.xlu0 %69
  %v71 = vld [vmem:[%s3] sm:$0x1]
  %72 = vmatpush.xpose.msra.mxu0 0.0
  %73 = vmatpush.xpose.msra.mxu0 0.0
  %74 = vmatpush.xpose.msra.mxu0 0.0
  %75 = vmatpush.xpose.msra.mxu0 0.0
  %76 = vmatpush.xpose.msra.mxu0 0.0
  %77 = vmatpush.xpose.msra.mxu0 0.0
  %78 = vmatpush.xpose.msra.mxu0 0.0
  %79 = vmatpush.xpose.msra.mxu0 0.0
  %80 = vmatpush.xpose.msra.mxu0 0.0
  %81 = vmatpush.xpose.msra.mxu0 0.0
  %82 = vmatpush.xpose.msra.mxu0 0.0
  %83 = vmatpush.xpose.msra.mxu0 0.0
  %84 = vmatpush.xpose.msra.mxu0 0.0
  %85 = vmatpush.xpose.msra.mxu0 0.0
  %86 = vmatpush.xpose.msra.mxu0 %v59
  %87 = vmatpush.xpose.msra.mxu0 %v56
  %88 = vmatmul.f32.gmra.mxu0 %v71
  %v89 = vpop.f32.mrf.mxu0
  %v90 = vadd.f32 0.0, %v89
  %91 = vdwg.mxu0
  %v92 = vperm.slane %v90, 0
  %v93 = vadd.f32 %v68, %v92
  %v94 = vadd.f32 %v70, %v92
  %vm95 = vcmp.gt.f32.partialorder %v93, 0.0
  %vm96 = vcmp.gt.f32.partialorder %v94, 0.0
  %v97 = vmul.f32 %v93, 0.2
  %v98 = vmul.f32 %v94, 0.2
  %v99 = vsel %vm95, %v93, %v97
  %v100 = vsel %vm96, %v94, %v98
  %v101 = vlaneseq
  %v102 = vshrl.u32 %v101, 7
  %v103 = vadd.s32 %v102, 8
  %v104 = vlaneseq
  %v105 = vand.u32 %v104, 127
  %v106 = vld [vmem:[%s1] sm:$0xff]
  %v107 = vld [vmem:[%s1 + $0x8] sm:$0xff]
  %vm108 = vcmp.gt.f32.partialorder %v106, 0.0
  %vm109 = vcmp.gt.f32.partialorder %v107, 0.0
  %vm110 = vcmp.eq.s32.totalorder %v102, %v105
  %vm111 = vcmp.eq.s32.totalorder %v103, %v105
  %vm112 = vmor %vm108, %vm110
  %vm113 = vmor %vm109, %vm111
  %v114 = vsel %vm112, %v99, -1e+30
  %v115 = vsel %vm113, %v100, -1e+30
  %vm116 = vcmask 130048
  %v117 = vsel %vm116, %v114, -inf
  %118 = vmax.xlane.f32.xlu0 %v117
  %v119 = vpop.xlane.xlu0 %118
  %v120 = vsel %vm116, %v115, -inf
  %121 = vmax.xlane.f32.xlu0 %v120
  %v122 = vpop.xlane.xlu0 %121
  %v123 = vsub.f32 %v114, %v119
  %v124 = vsub.f32 %v115, %v122
  %v125 = vmul.f32 %v123, 1.442695
  %v126 = vpow.pop %v125
  %v127 = vmul.f32 %v124, 1.442695
  %v128 = vpow.pop %v127
  %v129 = vsel %vm116, %v126, 0.0
  %130 = vadd.xlane.f32.xlu0 %v129
  %v131 = vpop.xlane.xlu0 %130
  %v132 = vsel %vm116, %v128, 0.0
  %133 = vadd.xlane.f32.xlu0 %v132
  %v134 = vpop.xlane.xlu0 %133
  %v135 = vrcp.pop %v131
  %v136 = vrcp.pop %v134
  %v137 = vmul.f32 %v126, %v135
  %v138 = vmul.f32 %v128, %v136
  %v139 = vld [vmem:[%s5] sm:$0x1]
  %v141 = vperm.slane %v139, 0
  %v144 = vsel %vm116, %v137, 0
  %v147 = vsel %vm116, %v138, 0
  %149 = vmatpush.msra.mxu0 0.0
  %150 = vmatpush.msra.mxu0 0.0
  %151 = vmatpush.msra.mxu0 0.0
  %152 = vmatpush.msra.mxu0 0.0
  %153 = vmatpush.msra.mxu0 0.0
  %154 = vmatpush.msra.mxu0 0.0
  %155 = vmatpush.msra.mxu0 0.0
  %156 = vmatpush.msra.mxu0 0.0
  %157 = vmatpush.msra.mxu0 0.0
  %158 = vmatpush.msra.mxu0 0.0
  %159 = vmatpush.msra.mxu0 0.0
  %160 = vmatpush.msra.mxu0 0.0
  %161 = vmatpush.msra.mxu0 0.0
  %162 = vmatpush.msra.mxu0 0.0
  %163 = vmatpush.msra.mxu0 %v59
  %164 = vmatpush.msra.mxu0 %v56
  %165 = vmatmul.f32.gmra.mxu0 %v144
  %v166 = vpop.f32.mrf.mxu0
  %v167 = vadd.f32 %v141, %v166
  %168 = vmatmul.f32.gmra.mxu0 %v147
  %v169 = vpop.f32.mrf.mxu0
  %v170 = vadd.f32 %v141, %v169
  %171 = vdwg.mxu0
  %172 = vst [vmem:[%s7] sm:$0xff] %v167
  %173 = vst [vmem:[%s7 + $0x8] sm:$0xff] %v170
  %v174 = vld [vmem:[%s6] sm:$0x1]
  %v176 = vperm.slane %v174, 0
  %v178 = vmul.f32 %v167, %v176
  %v179 = vmul.f32 %v170, %v176
  %180 = vadd.xlane.f32.xlu0 %v178
  %v181 = vpop.xlane.xlu0 %180
  %182 = vadd.xlane.f32.xlu0 %v179
  %v183 = vpop.xlane.xlu0 %182
  %v184 = vxor.u32 %v181, 2147483648
  %v185 = vxor.u32 %v183, 2147483648
  %v186 = vmul.f32 %v184, 1.442695
  %v187 = vpow.pop %v186
  %v188 = vmul.f32 %v185, 1.442695
  %v189 = vpow.pop %v188
  %v190 = vadd.f32 %v187, 1.0
  %v191 = vadd.f32 %v189, 1.0
  %v192 = vrcp.pop %v190
  %v193 = vmul.f32 %v190, %v192
  %v194 = vsub.f32 1.0, %v193
  %v195 = vmul.f32 %v192, %v194
  %v196 = vadd.f32 %v192, %v195
  %vm197 = vweird.f32 %v190
  %vm198 = vweird.f32 %v192
  %vm199 = vmor %vm197, %vm198
  %v200 = vsel %vm199, %v192, %v196
  %v201 = vand.u32 2147483647, %v190
  %vm202 = vcmp.eq.f32.partialorder %v201, 8.507059e+37
  %v203 = vand.u32 %v190, 2147483648
  %v204 = vor.u32 1.1754944e-38, %v203
  %v205 = vsel %vm202, %v204, %v200
  %v206 = vmul.f32 1.0, %v205
  %v207 = vrcp.pop %v191
  %v208 = vmul.f32 %v191, %v207
  %v209 = vsub.f32 1.0, %v208
  %v210 = vmul.f32 %v207, %v209
  %v211 = vadd.f32 %v207, %v210
  %vm212 = vweird.f32 %v191
  %vm213 = vweird.f32 %v207
  %vm214 = vmor %vm212, %vm213
  %v215 = vsel %vm214, %v207, %v211
  %v216 = vand.u32 2147483647, %v191
  %vm217 = vcmp.eq.f32.partialorder %v216, 8.507059e+37
  %v218 = vand.u32 %v191, 2147483648
  %v219 = vor.u32 1.1754944e-38, %v218
  %v220 = vsel %vm217, %v219, %v215
  %v221 = vmul.f32 1.0, %v220
  %vm222 = vcmask 7168
  %223 = vst.msk [vmem:[%s8] sm:$0xff] %vm222, %v206
  %224 = vst.msk [vmem:[%s8 + $0x8] sm:$0xff] %vm222, %v221
  // Predicated region
  $region30: #{nngat_forward.3} parent=0 // pred_check
    _
  $region31: #{nngat_forward.3} parent=0 // pred_check_branch
    %226 = sbr.rel (0) target = $region33
  $region32: #{nngat_forward.3} parent=0 // pred_region
    _
  $region33: #{nngat_forward.3} parent=0 // pred_fallthru
    _
  // Predicated region
  $region34: #{nngat_forward.3} parent=0 // pred_check
    _
  $region35: #{nngat_forward.3} parent=0 // pred_check_branch
    %228 = sbr.rel (0) target = $region37
  $region36: #{nngat_forward.3} parent=0 // pred_region
    _
  $region37: #{nngat_forward.3} parent=0 // pred_fallthru
    _
  // Predicated region
  $region38: #{nngat_forward.3} parent=0 // pred_check
    _
  $region39: #{nngat_forward.3} parent=0 // pred_check_branch
    %230 = sbr.rel (0) target = $region41
  $region40: #{nngat_forward.3} parent=0 // pred_region
    _
  $region41: #{nngat_forward.3} parent=0 // pred_fallthru
    _
  // Predicated region
  $region42: #{nngat_forward.3} parent=0 // pred_check
    _
  $region43: #{nngat_forward.3} parent=0 // pred_check_branch
    %232 = sbr.rel (0) target = $region45
  $region44: #{nngat_forward.3} parent=0 // pred_region
    _
  $region45: #{nngat_forward.3} parent=0 // pred_fallthru
    _

// kernel: nngat_forward.4
$region0: #{nngat_forward.4}
  #allocation0 [shape = 'u32[]', space=smem, size = 0x4, offset = 0x4, fixed_abs, tag = 'smem constant byte address 0x4 - core index']
  #allocation1 [shape = 'u32[72,128]{1,0:T(1,128)}', space=vmem, size = 0x9000, scoped, tag = 'internal scratch']
  %s0 = inlined_call_operand.vmem [shape: f32[16,128], index: 0, kind: input, shape index: {}]
  %s1 = inlined_call_operand.vmem [shape: s32[8,1], index: 1, kind: input, shape index: {}]
  %s2 = inlined_call_operand.vmem [shape: f32[8,1], index: 2, kind: input, shape index: {}]
  %s3 = inlined_call_operand.vmem [shape: f32[16,16], index: 3, kind: input, shape index: {}]
  %s4 = inlined_call_operand.vmem [shape: f32[16,16], index: 4, kind: input, shape index: {}]
  %s5 = inlined_call_operand.vmem [shape: f32[128,16], index: 5, kind: input, shape index: {}]
  %s6 = inlined_call_operand.vmem [shape: f32[1,16], index: 6, kind: input, shape index: {}]
  %s7 = inlined_call_operand.vmem [shape: f32[1,16], index: 7, kind: input, shape index: {}]
  %s8 = inlined_call_operand.vmem [shape: f32[1,16], index: 8, kind: input, shape index: {}]
  %s9 = inlined_call_operand.vmem [shape: f32[1,16], index: 9, kind: input, shape index: {}]
  %s10 = inlined_call_operand.vmem [shape: f32[8,128], index: 10, kind: output, shape index: {0}]
  %s11 = inlined_call_operand.vmem [shape: f32[8,16], index: 11, kind: output, shape index: {1}]
  %s12 = inlined_call_operand.vmem [shape: f32[8,1], index: 12, kind: output, shape index: {2}]
  %13 = xla_tuple %s10, %s11, %s12
  %s14 = sld [smem:[#allocation0]]
  $region66: #{nngat_forward.4} parent=0
    _
  %s16 = ssub.s32 1, %s14
  %s17 = scalar_select 0, %s16, %s14
  // Predicated region
  $region2: #{nngat_forward.4} parent=0 // pred_check
    _
  $region3: #{nngat_forward.4} parent=0 // pred_check_branch
    %19 = sbr.rel (0) target = $region5
  $region4: #{nngat_forward.4} parent=0 // pred_region
    _
  $region5: #{nngat_forward.4} parent=0 // pred_fallthru
    _
  // Predicated region
  $region6: #{nngat_forward.4} parent=0 // pred_check
    _
  $region7: #{nngat_forward.4} parent=0 // pred_check_branch
    %21 = sbr.rel (0) target = $region9
  $region8: #{nngat_forward.4} parent=0 // pred_region
    _
  $region9: #{nngat_forward.4} parent=0 // pred_fallthru
    _
  // Predicated region
  $region10: #{nngat_forward.4} parent=0 // pred_check
    _
  $region11: #{nngat_forward.4} parent=0 // pred_check_branch
    %23 = sbr.rel (0) target = $region13
  $region12: #{nngat_forward.4} parent=0 // pred_region
    _
  $region13: #{nngat_forward.4} parent=0 // pred_fallthru
    _
  // Predicated region
  $region14: #{nngat_forward.4} parent=0 // pred_check
    _
  $region15: #{nngat_forward.4} parent=0 // pred_check_branch
    %25 = sbr.rel (0) target = $region17
  $region16: #{nngat_forward.4} parent=0 // pred_region
    _
  $region17: #{nngat_forward.4} parent=0 // pred_fallthru
    _
  // Predicated region
  $region18: #{nngat_forward.4} parent=0 // pred_check
    _
  $region19: #{nngat_forward.4} parent=0 // pred_check_branch
    %27 = sbr.rel (0) target = $region21
  $region20: #{nngat_forward.4} parent=0 // pred_region
    _
  $region21: #{nngat_forward.4} parent=0 // pred_fallthru
    _
  // Predicated region
  $region22: #{nngat_forward.4} parent=0 // pred_check
    _
  $region23: #{nngat_forward.4} parent=0 // pred_check_branch
    %29 = sbr.rel (0) target = $region25
  $region24: #{nngat_forward.4} parent=0 // pred_region
    _
  $region25: #{nngat_forward.4} parent=0 // pred_fallthru
    _
  // Predicated region
  $region26: #{nngat_forward.4} parent=0 // pred_check
    _
  $region27: #{nngat_forward.4} parent=0 // pred_check_branch
    %31 = sbr.rel (0) target = $region29
  $region28: #{nngat_forward.4} parent=0 // pred_region
    _
  $region29: #{nngat_forward.4} parent=0 // pred_fallthru
    _
  // Predicated region
  $region30: #{nngat_forward.4} parent=0 // pred_check
    _
  $region31: #{nngat_forward.4} parent=0 // pred_check_branch
    %33 = sbr.rel (0) target = $region33
  $region32: #{nngat_forward.4} parent=0 // pred_region
    _
  $region33: #{nngat_forward.4} parent=0 // pred_fallthru
    _
  // Predicated region
  $region34: #{nngat_forward.4} parent=0 // pred_check
    _
  $region35: #{nngat_forward.4} parent=0 // pred_check_branch
    %35 = sbr.rel (0) target = $region37
  $region36: #{nngat_forward.4} parent=0 // pred_region
    _
  $region37: #{nngat_forward.4} parent=0 // pred_fallthru
    _
  // Predicated region
  $region38: #{nngat_forward.4} parent=0 // pred_check
    _
  $region39: #{nngat_forward.4} parent=0 // pred_check_branch
    %37 = sbr.rel (0) target = $region41
  $region40: #{nngat_forward.4} parent=0 // pred_region
    _
  $region41: #{nngat_forward.4} parent=0 // pred_fallthru
    _
  %v38 = vlaneseq
  %v39 = vand.u32 %v38, 127
  %v40 = vld [vmem:[%s1] sm:$0xff]
  %41 = vset.pattern.permute.xlu0 0
  %42 = vperm.xlu0 %41, %v40
  %v43 = vpop.permute.xlu0 %42
  %vm44 = vcmp.eq.s32.totalorder %v39, %v43
  %v45 = vsel %vm44, 1.0, 0.0
  %v46 = vld [vmem:[%s0] sm:$0xff]
  %v47 = vld [vmem:[%s0 + $0x8] sm:$0xff]
  %vm48 = vcmask 130048
  %v50 = vsel %vm48, %v45, 0
  %52 = vmatpush.msra.mxu0 0.0
  %53 = vmatpush.msra.mxu0 0.0
  %54 = vmatpush.msra.mxu0 0.0
  %55 = vmatpush.msra.mxu0 0.0
  %56 = vmatpush.msra.mxu0 0.0
  %57 = vmatpush.msra.mxu0 0.0
  %58 = vmatpush.msra.mxu0 0.0
  %59 = vmatpush.msra.mxu0 0.0
  %60 = vmatpush.msra.mxu0 0.0
  %61 = vmatpush.msra.mxu0 0.0
  %62 = vmatpush.msra.mxu0 0.0
  %63 = vmatpush.msra.mxu0 0.0
  %64 = vmatpush.msra.mxu0 0.0
  %65 = vmatpush.msra.mxu0 0.0
  %66 = vmatpush.msra.mxu0 %v47
  %67 = vmatpush.msra.mxu0 %v46
  %68 = vmatmul.f32.gmra.mxu0 %v50
  %v69 = vpop.f32.mrf.mxu0
  %v70 = vadd.f32 0.0, %v69
  %71 = vdwg.mxu0
  %v72 = vld [vmem:[%s2] sm:$0xff]
  %74 = vset.pattern.permute.xlu0 0
  %75 = vperm.xlu0 %74, %v72
  %v76 = vpop.permute.xlu0 %75
  %v78 = vmul.f32 %v70, %v76
  %79 = vst [vmem:[%s10] sm:$0xff] %v78
  %v80 = vld [vmem:[%s3] sm:$0xff]
  %v81 = vld [vmem:[%s3 + $0x8] sm:$0xff]
  %82 = vmatpush.msra.mxu0 0.0
  %83 = vmatpush.msra.mxu0 0.0
  %84 = vmatpush.msra.mxu0 0.0
  %85 = vmatpush.msra.mxu0 0.0
  %86 = vmatpush.msra.mxu0 0.0
  %87 = vmatpush.msra.mxu0 0.0
  %88 = vmatpush.msra.mxu0 0.0
  %89 = vmatpush.msra.mxu0 0.0
  %90 = vmatpush.msra.mxu0 0.0
  %91 = vmatpush.msra.mxu0 0.0
  %92 = vmatpush.msra.mxu0 0.0
  %93 = vmatpush.msra.mxu0 0.0
  %94 = vmatpush.msra.mxu0 0.0
  %95 = vmatpush.msra.mxu0 0.0
  %96 = vmatpush.msra.mxu0 %v81
  %97 = vmatpush.msra.mxu0 %v80
  %98 = vmatmul.f32.gmra.mxu0 %v50
  %v99 = vpop.f32.mrf.mxu0
  %v100 = vadd.f32 0.0, %v99
  %101 = vdwg.mxu0
  %v103 = vsel %vm48, %v100, 0
  %105 = vmatpush.xpose.msra.mxu0 0.0
  %106 = vmatpush.xpose.msra.mxu0 0.0
  %107 = vmatpush.xpose.msra.mxu0 0.0
  %108 = vmatpush.xpose.msra.mxu0 0.0
  %109 = vmatpush.xpose.msra.mxu0 0.0
  %110 = vmatpush.xpose.msra.mxu0 0.0
  %111 = vmatpush.xpose.msra.mxu0 0.0
  %112 = vmatpush.xpose.msra.mxu0 0.0
  %113 = vmatpush.xpose.msra.mxu0 0.0
  %114 = vmatpush.xpose.msra.mxu0 0.0
  %115 = vmatpush.xpose.msra.mxu0 0.0
  %116 = vmatpush.xpose.msra.mxu0 0.0
  %117 = vmatpush.xpose.msra.mxu0 0.0
  %118 = vmatpush.xpose.msra.mxu0 0.0
  %119 = vmatpush.xpose.msra.mxu0 0.0
  %120 = vmatpush.xpose.msra.mxu0 %v50
  %121 = vmatmul.f32.gmra.mxu0 %v103
  %v122 = vpop.f32.mrf.mxu0
  %v123 = vadd.f32 0.0, %v122
  %124 = vdwg.mxu0
  %v125 = vld [vmem:[%s4] sm:$0xff]
  %v126 = vld [vmem:[%s4 + $0x8] sm:$0xff]
  %127 = vmatpush.msra.mxu0 0.0
  %128 = vmatpush.msra.mxu0 0.0
  %129 = vmatpush.msra.mxu0 0.0
  %130 = vmatpush.msra.mxu0 0.0
  %131 = vmatpush.msra.mxu0 0.0
  %132 = vmatpush.msra.mxu0 0.0
  %133 = vmatpush.msra.mxu0 0.0
  %134 = vmatpush.msra.mxu0 0.0
  %135 = vmatpush.msra.mxu0 0.0
  %136 = vmatpush.msra.mxu0 0.0
  %137 = vmatpush.msra.mxu0 0.0
  %138 = vmatpush.msra.mxu0 0.0
  %139 = vmatpush.msra.mxu0 0.0
  %140 = vmatpush.msra.mxu0 0.0
  %141 = vmatpush.msra.mxu0 %v126
  %142 = vmatpush.msra.mxu0 %v125
  %143 = vmatmul.f32.gmra.mxu0 %v50
  %v144 = vpop.f32.mrf.mxu0
  %v145 = vadd.f32 0.0, %v144
  %146 = vdwg.mxu0
  %v148 = vsel %vm48, %v145, 0
  %150 = vmatpush.xpose.msra.mxu0 0.0
  %151 = vmatpush.xpose.msra.mxu0 0.0
  %152 = vmatpush.xpose.msra.mxu0 0.0
  %153 = vmatpush.xpose.msra.mxu0 0.0
  %154 = vmatpush.xpose.msra.mxu0 0.0
  %155 = vmatpush.xpose.msra.mxu0 0.0
  %156 = vmatpush.xpose.msra.mxu0 0.0
  %157 = vmatpush.xpose.msra.mxu0 0.0
  %158 = vmatpush.xpose.msra.mxu0 0.0
  %159 = vmatpush.xpose.msra.mxu0 0.0
  %160 = vmatpush.xpose.msra.mxu0 0.0
  %161 = vmatpush.xpose.msra.mxu0 0.0
  %162 = vmatpush.xpose.msra.mxu0 0.0
  %163 = vmatpush.xpose.msra.mxu0 0.0
  %164 = vmatpush.xpose.msra.mxu0 0.0
  %165 = vmatpush.xpose.msra.mxu0 %v50
  %166 = vmatmul.f32.gmra.mxu0 %v148
  %v167 = vpop.f32.mrf.mxu0
  %v168 = vadd.f32 0.0, %v167
  %169 = vdwg.mxu0
  %v170 = vlaneseq
  %v171 = vshrl.u32 %v170, 7
  %vm172 = vcmp.eq.s32.totalorder %v171, %v39
  %v173 = vsel %vm172, 1.0, 0.0
  %vm174 = vcmp.gt.f32.partialorder %v123, 0.0
  %v175 = vsel %vm174, %v168, 0.0
  %v176 = vadd.f32 %v175, %v173
  %vm177 = vcmask 64512
  %v179 = vsel %vm177, %v176, 0
  %181 = vmatpush.msra.mxu0 0.0
  %182 = vmatpush.msra.mxu0 0.0
  %183 = vmatpush.msra.mxu0 0.0
  %184 = vmatpush.msra.mxu0 0.0
  %185 = vmatpush.msra.mxu0 0.0
  %186 = vmatpush.msra.mxu0 0.0
  %187 = vmatpush.msra.mxu0 0.0
  %188 = vmatpush.msra.mxu0 0.0
  %189 = vmatpush.msra.mxu0 0.0
  %190 = vmatpush.msra.mxu0 0.0
  %191 = vmatpush.msra.mxu0 0.0
  %192 = vmatpush.msra.mxu0 0.0
  %193 = vmatpush.msra.mxu0 0.0
  %194 = vmatpush.msra.mxu0 0.0
  %195 = vmatpush.msra.mxu0 0.0
  %196 = vmatpush.msra.mxu0 %v176
  %197 = vmatmul.f32.gmra.mxu0 %v179
  %v198 = vpop.f32.mrf.mxu0
  %v199 = vadd.f32 0.0, %v198
  %200 = vdwg.mxu0
  %vm201 = vcmp.gt.f32.partialorder %v199, 0.0
  %v202 = vld [vmem:[%s5] sm:$0xff]
  %v203 = vld [vmem:[%s5 + $0x8] sm:$0xff]
  %v204 = vld [vmem:[%s5 + $0x10] sm:$0xff]
  %v205 = vld [vmem:[%s5 + $0x18] sm:$0xff]
  %v206 = vld [vmem:[%s5 + $0x20] sm:$0xff]
  %v207 = vld [vmem:[%s5 + $0x28] sm:$0xff]
  %v208 = vld [vmem:[%s5 + $0x30] sm:$0xff]
  %v209 = vld [vmem:[%s5 + $0x38] sm:$0xff]
  %v210 = vld [vmem:[%s5 + $0x40] sm:$0xff]
  %v211 = vld [vmem:[%s5 + $0x48] sm:$0xff]
  %v212 = vld [vmem:[%s5 + $0x50] sm:$0xff]
  %v213 = vld [vmem:[%s5 + $0x58] sm:$0xff]
  %v214 = vld [vmem:[%s5 + $0x60] sm:$0xff]
  %v215 = vld [vmem:[%s5 + $0x68] sm:$0xff]
  %v216 = vld [vmem:[%s5 + $0x70] sm:$0xff]
  %v217 = vld [vmem:[%s5 + $0x78] sm:$0xff]
  %218 = vmatpush.msra.mxu0 %v217
  %219 = vmatpush.msra.mxu0 %v216
  %220 = vmatpush.msra.mxu0 %v215
  %221 = vmatpush.msra.mxu0 %v214
  %222 = vmatpush.msra.mxu0 %v213
  %223 = vmatpush.msra.mxu0 %v212
  %224 = vmatpush.msra.mxu0 %v211
  %225 = vmatpush.msra.mxu0 %v210
  %226 = vmatpush.msra.mxu0 %v209
  %227 = vmatpush.msra.mxu0 %v208
  %228 = vmatpush.msra.mxu0 %v207
  %229 = vmatpush.msra.mxu0 %v206
  %230 = vmatpush.msra.mxu0 %v205
  %231 = vmatpush.msra.mxu0 %v204
  %232 = vmatpush.msra.mxu0 %v203
  %233 = vmatpush.msra.mxu0 %v202
  %234 = vmatmul.f32.gmra.mxu0 %v78
  %v235 = vpop.f32.mrf.mxu0
  %v236 = vadd.f32 0.0, %v235
  %237 = vdwg.mxu0
  %v238 = vld [vmem:[%s7] sm:$0x1]
  %v240 = vperm.slane %v238, 0
  %v242 = vmul.f32 %v236, %v240
  %v243 = vsel %vm48, %v242, 0.0
  %244 = vadd.xlane.f32.xlu0 %v243
  %v245 = vpop.xlane.xlu0 %244
  %v246 = vld [vmem:[%s6] sm:$0x1]
  %v248 = vsel %vm48, %v246, 0
  %v251 = vsel %vm48, %v236, 0
  %253 = vmatpush.xpose.msra.mxu0 0.0
  %254 = vmatpush.xpose.msra.mxu0 0.0
  %255 = vmatpush.xpose.msra.mxu0 0.0
  %256 = vmatpush.xpose.msra.mxu0 0.0
  %257 = vmatpush.xpose.msra.mxu0 0.0
  %258 = vmatpush.xpose.msra.mxu0 0.0
  %259 = vmatpush.xpose.msra.mxu0 0.0
  %260 = vmatpush.xpose.msra.mxu0 0.0
  %261 = vmatpush.xpose.msra.mxu0 0.0
  %262 = vmatpush.xpose.msra.mxu0 0.0
  %263 = vmatpush.xpose.msra.mxu0 0.0
  %264 = vmatpush.xpose.msra.mxu0 0.0
  %265 = vmatpush.xpose.msra.mxu0 0.0
  %266 = vmatpush.xpose.msra.mxu0 0.0
  %267 = vmatpush.xpose.msra.mxu0 0.0
  %268 = vmatpush.xpose.msra.mxu0 %v251
  %269 = vmatmul.f32.gmra.mxu0 %v248
  %v270 = vpop.f32.mrf.mxu0
  %v271 = vadd.f32 0.0, %v270
  %272 = vdwg.mxu0
  %v273 = vperm.slane %v271, 0
  %v274 = vadd.f32 %v245, %v273
  %vm275 = vcmp.gt.f32.partialorder %v274, 0.0
  %v276 = vmul.f32 %v274, 0.2
  %v277 = vsel %vm275, %v274, %v276
  %v278 = vsel %vm201, %v277, -1e+30
  %v279 = vsel %vm177, %v278, -inf
  %280 = vmax.xlane.f32.xlu0 %v279
  %v281 = vpop.xlane.xlu0 %280
  %v282 = vsub.f32 %v278, %v281
  %v283 = vmul.f32 %v282, 1.442695
  %v284 = vpow.pop %v283
  %v285 = vsel %vm177, %v284, 0.0
  %286 = vadd.xlane.f32.xlu0 %v285
  %v287 = vpop.xlane.xlu0 %286
  %v288 = vrcp.pop %v287
  %v289 = vmul.f32 %v284, %v288
  %v290 = vld [vmem:[%s8] sm:$0x1]
  %v292 = vperm.slane %v290, 0
  %v295 = vsel %vm177, %v289, 0
  %297 = vmatpush.msra.mxu0 0.0
  %298 = vmatpush.msra.mxu0 0.0
  %299 = vmatpush.msra.mxu0 0.0
  %300 = vmatpush.msra.mxu0 0.0
  %301 = vmatpush.msra.mxu0 0.0
  %302 = vmatpush.msra.mxu0 0.0
  %303 = vmatpush.msra.mxu0 0.0
  %304 = vmatpush.msra.mxu0 0.0
  %305 = vmatpush.msra.mxu0 0.0
  %306 = vmatpush.msra.mxu0 0.0
  %307 = vmatpush.msra.mxu0 0.0
  %308 = vmatpush.msra.mxu0 0.0
  %309 = vmatpush.msra.mxu0 0.0
  %310 = vmatpush.msra.mxu0 0.0
  %311 = vmatpush.msra.mxu0 0.0
  %312 = vmatpush.msra.mxu0 %v236
  %313 = vmatmul.f32.gmra.mxu0 %v295
  %v314 = vpop.f32.mrf.mxu0
  %v315 = vadd.f32 %v292, %v314
  %316 = vdwg.mxu0
  %317 = vst.msk [vmem:[%s11] sm:$0xff] %vm48, %v315
  %v318 = vld [vmem:[%s9] sm:$0x1]
  %v320 = vperm.slane %v318, 0
  %v322 = vmul.f32 %v315, %v320
  %v323 = vsel %vm48, %v322, 0.0
  %324 = vadd.xlane.f32.xlu0 %v323
  %v325 = vpop.xlane.xlu0 %324
  %v326 = vxor.u32 %v325, 2147483648
  %v327 = vmul.f32 %v326, 1.442695
  %v328 = vpow.pop %v327
  %v329 = vadd.f32 %v328, 1.0
  %v330 = vrcp.pop %v329
  %v331 = vmul.f32 %v329, %v330
  %v332 = vsub.f32 1.0, %v331
  %v333 = vmul.f32 %v330, %v332
  %v334 = vadd.f32 %v330, %v333
  %vm335 = vweird.f32 %v329
  %vm336 = vweird.f32 %v330
  %vm337 = vmor %vm335, %vm336
  %v338 = vsel %vm337, %v330, %v334
  %v339 = vand.u32 2147483647, %v329
  %vm340 = vcmp.eq.f32.partialorder %v339, 8.507059e+37
  %v341 = vand.u32 %v329, 2147483648
  %v342 = vor.u32 1.1754944e-38, %v341
  %v343 = vsel %vm340, %v342, %v338
  %v344 = vmul.f32 1.0, %v343
  %vm345 = vcmask 7168
  %346 = vst.msk [vmem:[%s12] sm:$0xff] %vm345, %v344
  // Predicated region
  $region42: #{nngat_forward.4} parent=0 // pred_check
    _
  $region43: #{nngat_forward.4} parent=0 // pred_check_branch
    %348 = sbr.rel (0) target = $region45
  $region44: #{nngat_forward.4} parent=0 // pred_region
    _
  $region45: #{nngat_forward.4} parent=0 // pred_fallthru
    _
  // Predicated region
  $region46: #{nngat_forward.4} parent=0 // pred_check
    _
  $region47: #{nngat_forward.4} parent=0 // pred_check_branch
    %350 = sbr.rel (0) target = $region49
  $region48: #{nngat_forward.4} parent=0 // pred_region
    _
  $region49: #{nngat_forward.4} parent=0 // pred_fallthru
    _
  // Predicated region
  $region50: #{nngat_forward.4} parent=0 // pred_check
    _
  $region51: #{nngat_forward.4} parent=0 // pred_check_branch
    %352 = sbr.rel (0) target = $region53
  $region52: #{nngat_forward.4} parent=0 // pred_region
    _
  $region53: #{nngat_forward.4} parent=0 // pred_fallthru
    _
  // Predicated region
  $region54: #{nngat_forward.4} parent=0 // pred_check
    _
  $region55: #{nngat_forward.4} parent=0 // pred_check_branch
    %354 = sbr.rel (0) target = $region57
  $region56: #{nngat_forward.4} parent=0 // pred_region
    _
  $region57: #{nngat_forward.4} parent=0 // pred_fallthru
    _
  // Predicated region
  $region58: #{nngat_forward.4} parent=0 // pred_check
    _
  $region59: #{nngat_forward.4} parent=0 // pred_check_branch
    %356 = sbr.rel (0) target = $region61
  $region60: #{nngat_forward.4} parent=0 // pred_region
    _
  $region61: #{nngat_forward.4} parent=0 // pred_fallthru
    _
  // Predicated region
  $region62: #{nngat_forward.4} parent=0 // pred_check
    _
  $region63: #{nngat_forward.4} parent=0 // pred_check_branch
    %358 = sbr.rel (0) target = $region65
  $region64: #{nngat_forward.4} parent=0 // pred_region
    _
  $region65: #{nngat_forward.4} parent=0 // pred_fallthru
    _

// kernel: nngat_forward.5
$region0: #{nngat_forward.5}
  #allocation0 [shape = 'u32[]', space=smem, size = 0x4, offset = 0x4, fixed_abs, tag = 'smem constant byte address 0x4 - core index']
  #allocation1 [shape = 'u32[72,128]{1,0:T(1,128)}', space=vmem, size = 0x9000, scoped, tag = 'internal scratch']
  %s0 = inlined_call_operand.vmem [shape: f32[8,128], index: 0, kind: input, shape index: {}]
  %s1 = inlined_call_operand.vmem [shape: f32[8,16], index: 1, kind: input, shape index: {}]
  %s2 = inlined_call_operand.vmem [shape: s32[4,1], index: 2, kind: input, shape index: {}]
  %s3 = inlined_call_operand.vmem [shape: f32[4,1], index: 3, kind: input, shape index: {}]
  %s4 = inlined_call_operand.vmem [shape: f32[128,16], index: 4, kind: input, shape index: {}]
  %s5 = inlined_call_operand.vmem [shape: f32[128,16], index: 5, kind: input, shape index: {}]
  %s6 = inlined_call_operand.vmem [shape: f32[16,16], index: 6, kind: input, shape index: {}]
  %s7 = inlined_call_operand.vmem [shape: f32[16,16], index: 7, kind: input, shape index: {}]
  %s8 = inlined_call_operand.vmem [shape: f32[1,16], index: 8, kind: input, shape index: {}]
  %s9 = inlined_call_operand.vmem [shape: f32[16,16], index: 9, kind: input, shape index: {}]
  %s10 = inlined_call_operand.vmem [shape: f32[1,16], index: 10, kind: input, shape index: {}]
  %s11 = inlined_call_operand.vmem [shape: f32[16,2], index: 11, kind: input, shape index: {}]
  %s12 = inlined_call_operand.vmem [shape: f32[1,2], index: 12, kind: input, shape index: {}]
  %s13 = inlined_call_operand.hbm [shape: f32[2,2], index: 13, kind: output, shape index: {}]
  %s14 = sld [smem:[#allocation0]]
  $region62: #{nngat_forward.5} parent=0
    _
  %s16 = ssub.s32 1, %s14
  %s17 = scalar_select 0, %s16, %s14
  $region1: #{nngat_forward.5} parent=0
    #allocation2 [shape = 'u8[1024]{0}', space=vmem, size = 0x400, scoped, tag = 'output window, operand 0, single buffered']
    #allocation3 [shape = 's32[1]{0}', space=sflag, size = 0x4, scoped, tag = 'scoped memory for nngat_forward.5']
    %18 = vsyncpa [#allocation3], 0
    // Predicated region
    $region2: #{nngat_forward.5} parent=1 // pred_check
      _
    $region3: #{nngat_forward.5} parent=1 // pred_check_branch
      %20 = sbr.rel (0) target = $region5
    $region4: #{nngat_forward.5} parent=1 // pred_region
      _
    $region5: #{nngat_forward.5} parent=1 // pred_fallthru
      _
    // Predicated region
    $region6: #{nngat_forward.5} parent=1 // pred_check
      _
    $region7: #{nngat_forward.5} parent=1 // pred_check_branch
      %22 = sbr.rel (0) target = $region9
    $region8: #{nngat_forward.5} parent=1 // pred_region
      _
    $region9: #{nngat_forward.5} parent=1 // pred_fallthru
      _
    // Predicated region
    $region10: #{nngat_forward.5} parent=1 // pred_check
      _
    $region11: #{nngat_forward.5} parent=1 // pred_check_branch
      %24 = sbr.rel (0) target = $region13
    $region12: #{nngat_forward.5} parent=1 // pred_region
      _
    $region13: #{nngat_forward.5} parent=1 // pred_fallthru
      _
    // Predicated region
    $region14: #{nngat_forward.5} parent=1 // pred_check
      _
    $region15: #{nngat_forward.5} parent=1 // pred_check_branch
      %26 = sbr.rel (0) target = $region17
    $region16: #{nngat_forward.5} parent=1 // pred_region
      _
    $region17: #{nngat_forward.5} parent=1 // pred_fallthru
      _
    // Predicated region
    $region18: #{nngat_forward.5} parent=1 // pred_check
      _
    $region19: #{nngat_forward.5} parent=1 // pred_check_branch
      %28 = sbr.rel (0) target = $region21
    $region20: #{nngat_forward.5} parent=1 // pred_region
      _
    $region21: #{nngat_forward.5} parent=1 // pred_fallthru
      _
    // Predicated region
    $region22: #{nngat_forward.5} parent=1 // pred_check
      _
    $region23: #{nngat_forward.5} parent=1 // pred_check_branch
      %30 = sbr.rel (0) target = $region25
    $region24: #{nngat_forward.5} parent=1 // pred_region
      _
    $region25: #{nngat_forward.5} parent=1 // pred_fallthru
      _
    // Predicated region
    $region26: #{nngat_forward.5} parent=1 // pred_check
      _
    $region27: #{nngat_forward.5} parent=1 // pred_check_branch
      %32 = sbr.rel (0) target = $region29
    $region28: #{nngat_forward.5} parent=1 // pred_region
      _
    $region29: #{nngat_forward.5} parent=1 // pred_fallthru
      _
    // Predicated region
    $region30: #{nngat_forward.5} parent=1 // pred_check
      _
    $region31: #{nngat_forward.5} parent=1 // pred_check_branch
      %34 = sbr.rel (0) target = $region33
    $region32: #{nngat_forward.5} parent=1 // pred_region
      _
    $region33: #{nngat_forward.5} parent=1 // pred_fallthru
      _
    // Predicated region
    $region34: #{nngat_forward.5} parent=1 // pred_check
      _
    $region35: #{nngat_forward.5} parent=1 // pred_check_branch
      %36 = sbr.rel (0) target = $region37
    $region36: #{nngat_forward.5} parent=1 // pred_region
      _
    $region37: #{nngat_forward.5} parent=1 // pred_fallthru
      _
    // Predicated region
    $region38: #{nngat_forward.5} parent=1 // pred_check
      _
    $region39: #{nngat_forward.5} parent=1 // pred_check_branch
      %38 = sbr.rel (0) target = $region41
    $region40: #{nngat_forward.5} parent=1 // pred_region
      _
    $region41: #{nngat_forward.5} parent=1 // pred_fallthru
      _
    // Predicated region
    $region42: #{nngat_forward.5} parent=1 // pred_check
      _
    $region43: #{nngat_forward.5} parent=1 // pred_check_branch
      %40 = sbr.rel (0) target = $region45
    $region44: #{nngat_forward.5} parent=1 // pred_region
      _
    $region45: #{nngat_forward.5} parent=1 // pred_fallthru
      _
    // Predicated region
    $region46: #{nngat_forward.5} parent=1 // pred_check
      _
    $region47: #{nngat_forward.5} parent=1 // pred_check_branch
      %42 = sbr.rel (0) target = $region49
    $region48: #{nngat_forward.5} parent=1 // pred_region
      _
    $region49: #{nngat_forward.5} parent=1 // pred_fallthru
      _
    // Predicated region
    $region50: #{nngat_forward.5} parent=1 // pred_check
      _
    $region51: #{nngat_forward.5} parent=1 // pred_check_branch
      %44 = sbr.rel (0) target = $region53
    $region52: #{nngat_forward.5} parent=1 // pred_region
      _
    $region53: #{nngat_forward.5} parent=1 // pred_fallthru
      _
    %v45 = vlaneseq
    %v46 = vand.u32 %v45, 127
    %v47 = vld [vmem:[%s2] sm:$0xf]
    %48 = vset.pattern.permute.xlu0 0
    %49 = vperm.xlu0 %48, %v47
    %v50 = vpop.permute.xlu0 %49
    %vm51 = vcmp.eq.s32.totalorder %v46, %v50
    %v52 = vsel %vm51, 1.0, 0.0
    %v53 = vld [vmem:[%s1] sm:$0xff]
    %vm54 = vcmask 64512
    %v56 = vsel %vm54, %v52, 0
    %58 = vmatpush.msra.mxu0 0.0
    %59 = vmatpush.msra.mxu0 0.0
    %60 = vmatpush.msra.mxu0 0.0
    %61 = vmatpush.msra.mxu0 0.0
    %62 = vmatpush.msra.mxu0 0.0
    %63 = vmatpush.msra.mxu0 0.0
    %64 = vmatpush.msra.mxu0 0.0
    %65 = vmatpush.msra.mxu0 0.0
    %66 = vmatpush.msra.mxu0 0.0
    %67 = vmatpush.msra.mxu0 0.0
    %68 = vmatpush.msra.mxu0 0.0
    %69 = vmatpush.msra.mxu0 0.0
    %70 = vmatpush.msra.mxu0 0.0
    %71 = vmatpush.msra.mxu0 0.0
    %72 = vmatpush.msra.mxu0 0.0
    %73 = vmatpush.msra.mxu0 %v53
    %74 = vmatmul.f32.gmra.mxu0 %v56
    %v75 = vpop.f32.mrf.mxu0
    %v76 = vadd.f32 0.0, %v75
    %77 = vdwg.mxu0
    %v78 = vld [vmem:[%s3] sm:$0xf]
    %80 = vset.pattern.permute.xlu0 0
    %81 = vperm.xlu0 %80, %v78
    %v82 = vpop.permute.xlu0 %81
    %v84 = vmul.f32 %v76, %v82
    %v85 = vld [vmem:[%s0] sm:$0xf]
    %vm86 = vcmask 1043456
    %v87 = vsel %vm86, %v85, -inf
    %v88 = vrot.slane %v87, 4
    %v89 = vmax.f32 %v87, %v88
    %v90 = vrot.slane %v89, 2
    %v91 = vmax.f32 %v89, %v90
    %v92 = vrot.slane %v91, 1
    %v93 = vmax.f32 %v91, %v92
    %v94 = vsel %vm86, %v85, 0.0
    %v95 = vrot.slane %v94, 4
    %v96 = vadd.f32 %v94, %v95
    %v97 = vrot.slane %v96, 2
    %v98 = vadd.f32 %v96, %v97
    %v99 = vrot.slane %v98, 1
    %v100 = vadd.f32 %v98, %v99
    %v101 = vrcp.pop 4.0
    %v102 = vmul.f32 4.0, %v101
    %v103 = vsub.f32 1.0, %v102
    %v104 = vmul.f32 %v101, %v103
    %v105 = vadd.f32 %v101, %v104
    %vm106 = vweird.f32 %v101
    %v107 = vsel %vm106, %v101, %v105
    %v108 = vmul.f32 %v100, %v107
    %vm109 = vcmask 123904
    %v110 = vsel %vm109, %v84, -inf
    %v111 = vrot.slane %v110, 4
    %v112 = vmax.f32 %v110, %v111
    %v113 = vrot.slane %v112, 2
    %v114 = vmax.f32 %v112, %v113
    %v115 = vrot.slane %v114, 1
    %v116 = vmax.f32 %v114, %v115
    %v117 = vsel %vm109, %v84, 0.0
    %v118 = vrot.slane %v117, 4
    %v119 = vadd.f32 %v117, %v118
    %v120 = vrot.slane %v119, 2
    %v121 = vadd.f32 %v119, %v120
    %v122 = vrot.slane %v121, 1
    %v123 = vadd.f32 %v121, %v122
    %v124 = vrcp.pop 2.0
    %v125 = vmul.f32 2.0, %v124
    %v126 = vsub.f32 1.0, %v125
    %v127 = vmul.f32 %v124, %v126
    %v128 = vadd.f32 %v124, %v127
    %vm129 = vweird.f32 %v124
    %v130 = vsel %vm129, %v124, %v128
    %v131 = vmul.f32 %v123, %v130
    %v132 = vld [vmem:[%s4] sm:$0xff]
    %v133 = vld [vmem:[%s4 + $0x8] sm:$0xff]
    %v134 = vld [vmem:[%s4 + $0x10] sm:$0xff]
    %v135 = vld [vmem:[%s4 + $0x18] sm:$0xff]
    %v136 = vld [vmem:[%s4 + $0x20] sm:$0xff]
    %v137 = vld [vmem:[%s4 + $0x28] sm:$0xff]
    %v138 = vld [vmem:[%s4 + $0x30] sm:$0xff]
    %v139 = vld [vmem:[%s4 + $0x38] sm:$0xff]
    %v140 = vld [vmem:[%s4 + $0x40] sm:$0xff]
    %v141 = vld [vmem:[%s4 + $0x48] sm:$0xff]
    %v142 = vld [vmem:[%s4 + $0x50] sm:$0xff]
    %v143 = vld [vmem:[%s4 + $0x58] sm:$0xff]
    %v144 = vld [vmem:[%s4 + $0x60] sm:$0xff]
    %v145 = vld [vmem:[%s4 + $0x68] sm:$0xff]
    %v146 = vld [vmem:[%s4 + $0x70] sm:$0xff]
    %v147 = vld [vmem:[%s4 + $0x78] sm:$0xff]
    %v148 = vld [vmem:[%s5] sm:$0xff]
    %v149 = vld [vmem:[%s5 + $0x8] sm:$0xff]
    %v150 = vld [vmem:[%s5 + $0x10] sm:$0xff]
    %v151 = vld [vmem:[%s5 + $0x18] sm:$0xff]
    %v152 = vld [vmem:[%s5 + $0x20] sm:$0xff]
    %v153 = vld [vmem:[%s5 + $0x28] sm:$0xff]
    %v154 = vld [vmem:[%s5 + $0x30] sm:$0xff]
    %v155 = vld [vmem:[%s5 + $0x38] sm:$0xff]
    %v156 = vld [vmem:[%s5 + $0x40] sm:$0xff]
    %v157 = vld [vmem:[%s5 + $0x48] sm:$0xff]
    %v158 = vld [vmem:[%s5 + $0x50] sm:$0xff]
    %v159 = vld [vmem:[%s5 + $0x58] sm:$0xff]
    %v160 = vld [vmem:[%s5 + $0x60] sm:$0xff]
    %v161 = vld [vmem:[%s5 + $0x68] sm:$0xff]
    %v162 = vld [vmem:[%s5 + $0x70] sm:$0xff]
    %v163 = vld [vmem:[%s5 + $0x78] sm:$0xff]
    %164 = vmatpush.msra.mxu0 %v163
    %165 = vmatpush.msra.mxu0 %v162
    %166 = vmatpush.msra.mxu0 %v161
    %167 = vmatpush.msra.mxu0 %v160
    %168 = vmatpush.msra.mxu0 %v159
    %169 = vmatpush.msra.mxu0 %v158
    %170 = vmatpush.msra.mxu0 %v157
    %171 = vmatpush.msra.mxu0 %v156
    %172 = vmatpush.msra.mxu0 %v155
    %173 = vmatpush.msra.mxu0 %v154
    %174 = vmatpush.msra.mxu0 %v153
    %175 = vmatpush.msra.mxu0 %v152
    %176 = vmatpush.msra.mxu0 %v151
    %177 = vmatpush.msra.mxu0 %v150
    %178 = vmatpush.msra.mxu0 %v149
    %179 = vmatpush.msra.mxu0 %v148
    %180 = vmatmul.f32.gmra.mxu0 %v108
    %v181 = vpop.f32.mrf.mxu0
    %v182 = vadd.f32 0.0, %v181
    %183 = vdwg.mxu0
    %184 = vmatpush.msra.mxu0 %v147
    %185 = vmatpush.msra.mxu0 %v146
    %186 = vmatpush.msra.mxu0 %v145
    %187 = vmatpush.msra.mxu0 %v144
    %188 = vmatpush.msra.mxu0 %v143
    %189 = vmatpush.msra.mxu0 %v142
    %190 = vmatpush.msra.mxu0 %v141
    %191 = vmatpush.msra.mxu0 %v140
    %192 = vmatpush.msra.mxu0 %v139
    %193 = vmatpush.msra.mxu0 %v138
    %194 = vmatpush.msra.mxu0 %v137
    %195 = vmatpush.msra.mxu0 %v136
    %196 = vmatpush.msra.mxu0 %v135
    %197 = vmatpush.msra.mxu0 %v134
    %198 = vmatpush.msra.mxu0 %v133
    %199 = vmatpush.msra.mxu0 %v132
    %200 = vmatmul.f32.gmra.mxu0 %v93
    %v201 = vpop.f32.mrf.mxu0
    %v202 = vadd.f32 %v182, %v201
    %203 = vdwg.mxu0
    %v204 = vld [vmem:[%s6] sm:$0xff]
    %v205 = vld [vmem:[%s6 + $0x8] sm:$0xff]
    %vm206 = vcmask 130048
    %v208 = vsel %vm206, %v116, 0
    %210 = vmatpush.msra.mxu0 0.0
    %211 = vmatpush.msra.mxu0 0.0
    %212 = vmatpush.msra.mxu0 0.0
    %213 = vmatpush.msra.mxu0 0.0
    %214 = vmatpush.msra.mxu0 0.0
    %215 = vmatpush.msra.mxu0 0.0
    %216 = vmatpush.msra.mxu0 0.0
    %217 = vmatpush.msra.mxu0 0.0
    %218 = vmatpush.msra.mxu0 0.0
    %219 = vmatpush.msra.mxu0 0.0
    %220 = vmatpush.msra.mxu0 0.0
    %221 = vmatpush.msra.mxu0 0.0
    %222 = vmatpush.msra.mxu0 0.0
    %223 = vmatpush.msra.mxu0 0.0
    %224 = vmatpush.msra.mxu0 %v205
    %225 = vmatpush.msra.mxu0 %v204
    %226 = vmatmul.f32.gmra.mxu0 %v208
    %v227 = vpop.f32.mrf.mxu0
    %v228 = vadd.f32 0.0, %v227
    %229 = vdwg.mxu0
    %v230 = vadd.f32 %v202, %v228
    %v231 = vld [vmem:[%s7] sm:$0xff]
    %v232 = vld [vmem:[%s7 + $0x8] sm:$0xff]
    %v234 = vsel %vm206, %v131, 0
    %236 = vmatpush.msra.mxu0 0.0
    %237 = vmatpush.msra.mxu0 0.0
    %238 = vmatpush.msra.mxu0 0.0
    %239 = vmatpush.msra.mxu0 0.0
    %240 = vmatpush.msra.mxu0 0.0
    %241 = vmatpush.msra.mxu0 0.0
    %242 = vmatpush.msra.mxu0 0.0
    %243 = vmatpush.msra.mxu0 0.0
    %244 = vmatpush.msra.mxu0 0.0
    %245 = vmatpush.msra.mxu0 0.0
    %246 = vmatpush.msra.mxu0 0.0
    %247 = vmatpush.msra.mxu0 0.0
    %248 = vmatpush.msra.mxu0 0.0
    %249 = vmatpush.msra.mxu0 0.0
    %250 = vmatpush.msra.mxu0 %v232
    %251 = vmatpush.msra.mxu0 %v231
    %252 = vmatmul.f32.gmra.mxu0 %v234
    %v253 = vpop.f32.mrf.mxu0
    %v254 = vadd.f32 0.0, %v253
    %255 = vdwg.mxu0
    %v256 = vadd.f32 %v230, %v254
    %v257 = vld [vmem:[%s8] sm:$0x1]
    %v258 = vadd.f32 %v256, %v257
    %v259 = vmax.f32 %v258, 0.0
    %v260 = vld [vmem:[%s9] sm:$0xff]
    %v261 = vld [vmem:[%s9 + $0x8] sm:$0xff]
    %v262 = vld [vmem:[%s10] sm:$0x1]
    %v264 = vsel %vm206, %v259, 0
    %266 = vmatpush.msra.mxu0 0.0
    %267 = vmatpush.msra.mxu0 0.0
    %268 = vmatpush.msra.mxu0 0.0
    %269 = vmatpush.msra.mxu0 0.0
    %270 = vmatpush.msra.mxu0 0.0
    %271 = vmatpush.msra.mxu0 0.0
    %272 = vmatpush.msra.mxu0 0.0
    %273 = vmatpush.msra.mxu0 0.0
    %274 = vmatpush.msra.mxu0 0.0
    %275 = vmatpush.msra.mxu0 0.0
    %276 = vmatpush.msra.mxu0 0.0
    %277 = vmatpush.msra.mxu0 0.0
    %278 = vmatpush.msra.mxu0 0.0
    %279 = vmatpush.msra.mxu0 0.0
    %280 = vmatpush.msra.mxu0 %v261
    %281 = vmatpush.msra.mxu0 %v260
    %282 = vmatmul.f32.gmra.mxu0 %v264
    %v283 = vpop.f32.mrf.mxu0
    %v284 = vadd.f32 %v262, %v283
    %285 = vdwg.mxu0
    %v286 = vmax.f32 %v284, 0.0
    %v287 = vld [vmem:[%s11] sm:$0xff]
    %v288 = vld [vmem:[%s11 + $0x8] sm:$0xff]
    %v289 = vld [vmem:[%s12] sm:$0x1]
    %v291 = vsel %vm206, %v286, 0
    %293 = vmatpush.msra.mxu0 0.0
    %294 = vmatpush.msra.mxu0 0.0
    %295 = vmatpush.msra.mxu0 0.0
    %296 = vmatpush.msra.mxu0 0.0
    %297 = vmatpush.msra.mxu0 0.0
    %298 = vmatpush.msra.mxu0 0.0
    %299 = vmatpush.msra.mxu0 0.0
    %300 = vmatpush.msra.mxu0 0.0
    %301 = vmatpush.msra.mxu0 0.0
    %302 = vmatpush.msra.mxu0 0.0
    %303 = vmatpush.msra.mxu0 0.0
    %304 = vmatpush.msra.mxu0 0.0
    %305 = vmatpush.msra.mxu0 0.0
    %306 = vmatpush.msra.mxu0 0.0
    %307 = vmatpush.msra.mxu0 %v288
    %308 = vmatpush.msra.mxu0 %v287
    %309 = vmatmul.f32.gmra.mxu0 %v291
    %v310 = vpop.f32.mrf.mxu0
    %v311 = vadd.f32 %v289, %v310
    %312 = vdwg.mxu0
    %vm313 = vcmask 8192
    %v314 = vsel %vm313, %v311, -inf
    %315 = vmax.xlane.f32.xlu0 %v314
    %v316 = vpop.xlane.xlu0 %315
    %v317 = vsub.f32 %v311, %v316
    %v318 = vmul.f32 %v317, 1.442695
    %v319 = vpow.pop %v318
    %v320 = vsel %vm313, %v319, 0.0
    %321 = vadd.xlane.f32.xlu0 %v320
    %v322 = vpop.xlane.xlu0 %321
    %v323 = vlog2.pop %v322
    %v324 = vmul.f32 %v323, 0.6931472
    %v325 = vadd.f32 %v316, %v324
    %v326 = vsub.f32 %v311, %v325
    %327 = vst.msk [vmem:[#allocation2] sm:$0x1] %vm313, %v326
    %v328 = vld [vmem:[%s0 + $0x4] sm:$0xf]
    %v329 = vsel %vm86, %v328, -inf
    %v330 = vrot.slane %v329, 4
    %v331 = vmax.f32 %v329, %v330
    %v332 = vrot.slane %v331, 2
    %v333 = vmax.f32 %v331, %v332
    %v334 = vrot.slane %v333, 1
    %v335 = vmax.f32 %v333, %v334
    %v336 = vsel %vm86, %v328, 0.0
    %v337 = vrot.slane %v336, 4
    %v338 = vadd.f32 %v336, %v337
    %v339 = vrot.slane %v338, 2
    %v340 = vadd.f32 %v338, %v339
    %v341 = vrot.slane %v340, 1
    %v342 = vadd.f32 %v340, %v341
    %v343 = vmul.f32 %v342, %v107
    %vm344 = vcmask 125954
    %v345 = vsel %vm344, %v84, -inf
    %v346 = vrot.slane %v345, 4
    %v347 = vmax.f32 %v345, %v346
    %v348 = vrot.slane %v347, 2
    %v349 = vmax.f32 %v347, %v348
    %v350 = vrot.slane %v349, 1
    %v351 = vmax.f32 %v349, %v350
    %v353 = vrot.slane %v84, 2
    %v355 = vsel %vm109, %v353, 0.0
    %v356 = vrot.slane %v355, 4
    %v357 = vadd.f32 %v355, %v356
    %v358 = vrot.slane %v357, 2
    %v359 = vadd.f32 %v357, %v358
    %v360 = vrot.slane %v359, 1
    %v361 = vadd.f32 %v359, %v360
    %v362 = vmul.f32 %v361, %v130
    %v363 = vld [vmem:[%s4] sm:$0xff]
    %v364 = vld [vmem:[%s4 + $0x8] sm:$0xff]
    %v365 = vld [vmem:[%s4 + $0x10] sm:$0xff]
    %v366 = vld [vmem:[%s4 + $0x18] sm:$0xff]
    %v367 = vld [vmem:[%s4 + $0x20] sm:$0xff]
    %v368 = vld [vmem:[%s4 + $0x28] sm:$0xff]
    %v369 = vld [vmem:[%s4 + $0x30] sm:$0xff]
    %v370 = vld [vmem:[%s4 + $0x38] sm:$0xff]
    %v371 = vld [vmem:[%s4 + $0x40] sm:$0xff]
    %v372 = vld [vmem:[%s4 + $0x48] sm:$0xff]
    %v373 = vld [vmem:[%s4 + $0x50] sm:$0xff]
    %v374 = vld [vmem:[%s4 + $0x58] sm:$0xff]
    %v375 = vld [vmem:[%s4 + $0x60] sm:$0xff]
    %v376 = vld [vmem:[%s4 + $0x68] sm:$0xff]
    %v377 = vld [vmem:[%s4 + $0x70] sm:$0xff]
    %v378 = vld [vmem:[%s4 + $0x78] sm:$0xff]
    %v379 = vld [vmem:[%s5] sm:$0xff]
    %v380 = vld [vmem:[%s5 + $0x8] sm:$0xff]
    %v381 = vld [vmem:[%s5 + $0x10] sm:$0xff]
    %v382 = vld [vmem:[%s5 + $0x18] sm:$0xff]
    %v383 = vld [vmem:[%s5 + $0x20] sm:$0xff]
    %v384 = vld [vmem:[%s5 + $0x28] sm:$0xff]
    %v385 = vld [vmem:[%s5 + $0x30] sm:$0xff]
    %v386 = vld [vmem:[%s5 + $0x38] sm:$0xff]
    %v387 = vld [vmem:[%s5 + $0x40] sm:$0xff]
    %v388 = vld [vmem:[%s5 + $0x48] sm:$0xff]
    %v389 = vld [vmem:[%s5 + $0x50] sm:$0xff]
    %v390 = vld [vmem:[%s5 + $0x58] sm:$0xff]
    %v391 = vld [vmem:[%s5 + $0x60] sm:$0xff]
    %v392 = vld [vmem:[%s5 + $0x68] sm:$0xff]
    %v393 = vld [vmem:[%s5 + $0x70] sm:$0xff]
    %v394 = vld [vmem:[%s5 + $0x78] sm:$0xff]
    %395 = vmatpush.msra.mxu0 %v394
    %396 = vmatpush.msra.mxu0 %v393
    %397 = vmatpush.msra.mxu0 %v392
    %398 = vmatpush.msra.mxu0 %v391
    %399 = vmatpush.msra.mxu0 %v390
    %400 = vmatpush.msra.mxu0 %v389
    %401 = vmatpush.msra.mxu0 %v388
    %402 = vmatpush.msra.mxu0 %v387
    %403 = vmatpush.msra.mxu0 %v386
    %404 = vmatpush.msra.mxu0 %v385
    %405 = vmatpush.msra.mxu0 %v384
    %406 = vmatpush.msra.mxu0 %v383
    %407 = vmatpush.msra.mxu0 %v382
    %408 = vmatpush.msra.mxu0 %v381
    %409 = vmatpush.msra.mxu0 %v380
    %410 = vmatpush.msra.mxu0 %v379
    %411 = vmatmul.f32.gmra.mxu0 %v343
    %v412 = vpop.f32.mrf.mxu0
    %v413 = vadd.f32 0.0, %v412
    %414 = vdwg.mxu0
    %415 = vmatpush.msra.mxu0 %v378
    %416 = vmatpush.msra.mxu0 %v377
    %417 = vmatpush.msra.mxu0 %v376
    %418 = vmatpush.msra.mxu0 %v375
    %419 = vmatpush.msra.mxu0 %v374
    %420 = vmatpush.msra.mxu0 %v373
    %421 = vmatpush.msra.mxu0 %v372
    %422 = vmatpush.msra.mxu0 %v371
    %423 = vmatpush.msra.mxu0 %v370
    %424 = vmatpush.msra.mxu0 %v369
    %425 = vmatpush.msra.mxu0 %v368
    %426 = vmatpush.msra.mxu0 %v367
    %427 = vmatpush.msra.mxu0 %v366
    %428 = vmatpush.msra.mxu0 %v365
    %429 = vmatpush.msra.mxu0 %v364
    %430 = vmatpush.msra.mxu0 %v363
    %431 = vmatmul.f32.gmra.mxu0 %v335
    %v432 = vpop.f32.mrf.mxu0
    %v433 = vadd.f32 %v413, %v432
    %434 = vdwg.mxu0
    %v435 = vld [vmem:[%s6] sm:$0xff]
    %v436 = vld [vmem:[%s6 + $0x8] sm:$0xff]
    %v438 = vsel %vm206, %v351, 0
    %440 = vmatpush.msra.mxu0 0.0
    %441 = vmatpush.msra.mxu0 0.0
    %442 = vmatpush.msra.mxu0 0.0
    %443 = vmatpush.msra.mxu0 0.0
    %444 = vmatpush.msra.mxu0 0.0
    %445 = vmatpush.msra.mxu0 0.0
    %446 = vmatpush.msra.mxu0 0.0
    %447 = vmatpush.msra.mxu0 0.0
    %448 = vmatpush.msra.mxu0 0.0
    %449 = vmatpush.msra.mxu0 0.0
    %450 = vmatpush.msra.mxu0 0.0
    %451 = vmatpush.msra.mxu0 0.0
    %452 = vmatpush.msra.mxu0 0.0
    %453 = vmatpush.msra.mxu0 0.0
    %454 = vmatpush.msra.mxu0 %v436
    %455 = vmatpush.msra.mxu0 %v435
    %456 = vmatmul.f32.gmra.mxu0 %v438
    %v457 = vpop.f32.mrf.mxu0
    %v458 = vadd.f32 0.0, %v457
    %459 = vdwg.mxu0
    %v460 = vadd.f32 %v433, %v458
    %v461 = vld [vmem:[%s7] sm:$0xff]
    %v462 = vld [vmem:[%s7 + $0x8] sm:$0xff]
    %v464 = vsel %vm206, %v362, 0
    %466 = vmatpush.msra.mxu0 0.0
    %467 = vmatpush.msra.mxu0 0.0
    %468 = vmatpush.msra.mxu0 0.0
    %469 = vmatpush.msra.mxu0 0.0
    %470 = vmatpush.msra.mxu0 0.0
    %471 = vmatpush.msra.mxu0 0.0
    %472 = vmatpush.msra.mxu0 0.0
    %473 = vmatpush.msra.mxu0 0.0
    %474 = vmatpush.msra.mxu0 0.0
    %475 = vmatpush.msra.mxu0 0.0
    %476 = vmatpush.msra.mxu0 0.0
    %477 = vmatpush.msra.mxu0 0.0
    %478 = vmatpush.msra.mxu0 0.0
    %479 = vmatpush.msra.mxu0 0.0
    %480 = vmatpush.msra.mxu0 %v462
    %481 = vmatpush.msra.mxu0 %v461
    %482 = vmatmul.f32.gmra.mxu0 %v464
    %v483 = vpop.f32.mrf.mxu0
    %v484 = vadd.f32 0.0, %v483
    %485 = vdwg.mxu0
    %v486 = vadd.f32 %v460, %v484
    %v487 = vld [vmem:[%s8] sm:$0x1]
    %v488 = vadd.f32 %v486, %v487
    %v489 = vmax.f32 %v488, 0.0
    %v490 = vld [vmem:[%s9] sm:$0xff]
    %v491 = vld [vmem:[%s9 + $0x8] sm:$0xff]
    %v492 = vld [vmem:[%s10] sm:$0x1]
    %v494 = vsel %vm206, %v489, 0
    %496 = vmatpush.msra.mxu0 0.0
    %497 = vmatpush.msra.mxu0 0.0
    %498 = vmatpush.msra.mxu0 0.0
    %499 = vmatpush.msra.mxu0 0.0
    %500 = vmatpush.msra.mxu0 0.0
    %501 = vmatpush.msra.mxu0 0.0
    %502 = vmatpush.msra.mxu0 0.0
    %503 = vmatpush.msra.mxu0 0.0
    %504 = vmatpush.msra.mxu0 0.0
    %505 = vmatpush.msra.mxu0 0.0
    %506 = vmatpush.msra.mxu0 0.0
    %507 = vmatpush.msra.mxu0 0.0
    %508 = vmatpush.msra.mxu0 0.0
    %509 = vmatpush.msra.mxu0 0.0
    %510 = vmatpush.msra.mxu0 %v491
    %511 = vmatpush.msra.mxu0 %v490
    %512 = vmatmul.f32.gmra.mxu0 %v494
    %v513 = vpop.f32.mrf.mxu0
    %v514 = vadd.f32 %v492, %v513
    %515 = vdwg.mxu0
    %v516 = vmax.f32 %v514, 0.0
    %v517 = vld [vmem:[%s11] sm:$0xff]
    %v518 = vld [vmem:[%s11 + $0x8] sm:$0xff]
    %v519 = vld [vmem:[%s12] sm:$0x1]
    %v521 = vsel %vm206, %v516, 0
    %523 = vmatpush.msra.mxu0 0.0
    %524 = vmatpush.msra.mxu0 0.0
    %525 = vmatpush.msra.mxu0 0.0
    %526 = vmatpush.msra.mxu0 0.0
    %527 = vmatpush.msra.mxu0 0.0
    %528 = vmatpush.msra.mxu0 0.0
    %529 = vmatpush.msra.mxu0 0.0
    %530 = vmatpush.msra.mxu0 0.0
    %531 = vmatpush.msra.mxu0 0.0
    %532 = vmatpush.msra.mxu0 0.0
    %533 = vmatpush.msra.mxu0 0.0
    %534 = vmatpush.msra.mxu0 0.0
    %535 = vmatpush.msra.mxu0 0.0
    %536 = vmatpush.msra.mxu0 0.0
    %537 = vmatpush.msra.mxu0 %v518
    %538 = vmatpush.msra.mxu0 %v517
    %539 = vmatmul.f32.gmra.mxu0 %v521
    %v540 = vpop.f32.mrf.mxu0
    %v541 = vadd.f32 %v519, %v540
    %542 = vdwg.mxu0
    %v543 = vsel %vm313, %v541, -inf
    %544 = vmax.xlane.f32.xlu0 %v543
    %v545 = vpop.xlane.xlu0 %544
    %v546 = vsub.f32 %v541, %v545
    %v547 = vmul.f32 %v546, 1.442695
    %v548 = vpow.pop %v547
    %v549 = vsel %vm313, %v548, 0.0
    %550 = vadd.xlane.f32.xlu0 %v549
    %v551 = vpop.xlane.xlu0 %550
    %v552 = vlog2.pop %v551
    %v553 = vmul.f32 %v552, 0.6931472
    %v554 = vadd.f32 %v545, %v553
    %v555 = vsub.f32 %v541, %v554
    %556 = vst.msk [vmem:[#allocation2 + $0x1] sm:$0x1] %vm313, %v555
    // Predicated region
    $region54: #{nngat_forward.5} parent=1 // pred_check
      _
    $region55: #{nngat_forward.5} parent=1 // pred_check_branch
      %558 = sbr.rel (0) target = $region57
    $region56: #{nngat_forward.5} parent=1 // pred_region
      %560 = vsyncadd [#allocation3], 0
      %s562 = sshll.u32 [#allocation2], 4
      %s563 = int_to_ptr.vmem [resolvable:$true] %s562
      %s564 = sshll.u32 %s13, 4
      %s565 = int_to_ptr.hbm [resolvable:$true] %s564
      %567 = dma.vmem_to_hbm [thread:$0]  %s563, 32, %s565, [#allocation3]
    $region57: #{nngat_forward.5} parent=1 // pred_fallthru
      _
    // Predicated region
    $region58: #{nngat_forward.5} parent=1 // pred_check
      _
    $region59: #{nngat_forward.5} parent=1 // pred_check_branch
      %569 = sbr.rel (0) target = $region61
    $region60: #{nngat_forward.5} parent=1 // pred_region
      %571 = dma.done [#allocation3], 32
    $region61: #{nngat_forward.5} parent=1 // pred_fallthru
      _
    %572 = vsyncpa [#allocation3], 1

</llo_original>
